<compile_context>
chip_gen: v6e
topology: v6e:2x2x1
jax: 0.10.0
libtpu: 0.0.40
codegen_flags: <defaults>
</compile_context>

<pallas_src>
import functools

import jax
import jax.numpy as jnp
from jax.experimental import pallas as pl
from jax.experimental.pallas import tpu as pltpu


# ----------------------------------------------------------------------------
# Fused decoder-layer kernel (one grid step per batch element)
# ----------------------------------------------------------------------------
def _refine_layer_kernel(frame_ref, query_ref,
                         wq_ref, bq_ref, wkv_ref, bkv_ref, wo_ref, bo_ref,
                         n1g_ref, n1b_ref,
                         ffn_w_ref, ffn_b_ref, n2g_ref, n2b_ref,
                         out_ref, attnw_ref, *, n_heads, eps):
    f = frame_ref[0]          # [Nf, D]   (queries of the cross-attention)
    qv = query_ref[0]         # [Nq, D]   (keys / values)
    D = f.shape[-1]
    dh = D // n_heads
    scale = 1.0 / float(dh) ** 0.5

    # --- projections (fused K|V weight -> one lane-dense [D, 2D] matmul) ---
    q = jnp.dot(f, wq_ref[...], preferred_element_type=jnp.float32) + bq_ref[...]
    kv = jnp.dot(qv, wkv_ref[...], preferred_element_type=jnp.float32) + bkv_ref[...]
    k = kv[:, :D]
    v = kv[:, D:]

    # --- per-head scaled-dot-product attention (heads unrolled, MXU matmuls) ---
    o_heads = []
    attn_acc = None
    for h in range(n_heads):
        sl = slice(h * dh, (h + 1) * dh)
        # q_h @ k_h^T without an explicit transpose (contract last dims of both)
        s = jax.lax.dot_general(q[:, sl], k[:, sl], (((1,), (1,)), ((), ())),
                                preferred_element_type=jnp.float32) * scale   # [Nf, Nq]
        s = s - jnp.max(s, axis=-1, keepdims=True)
        e = jnp.exp(s)
        p = e * pl.reciprocal(jnp.sum(e, axis=-1, keepdims=True), approx=True)
        attn_acc = p if attn_acc is None else attn_acc + p
        o_heads.append(jnp.dot(p, v[:, sl], preferred_element_type=jnp.float32))

    # head-averaged attention weights (nn.MultiheadAttention default average_attn_weights=True)
    attnw_ref[0] = attn_acc * (1.0 / n_heads)

    o = jnp.concatenate(o_heads, axis=-1)                                      # [Nf, D]
    attn_out = jnp.dot(o, wo_ref[...], preferred_element_type=jnp.float32) + bo_ref[...]

    def _ln(x, g, b):
        mu = jnp.mean(x, axis=-1, keepdims=True)
        c = x - mu
        var = jnp.mean(c * c, axis=-1, keepdims=True)
        return c * jax.lax.rsqrt(var + eps) * g + b

    # --- residual + LayerNorm1 ---      (dropout1 = identity in eval mode)
    h1 = _ln(f + attn_out, n1g_ref[...], n1b_ref[...])

    # --- ffn1 = Linear -> (Dropout=identity) -> LayerNorm, NO residual ---
    y = jnp.dot(h1, ffn_w_ref[...], preferred_element_type=jnp.float32) + ffn_b_ref[...]
    out_ref[0] = _ln(y, n2g_ref[...], n2b_ref[...])
    # TODO(synk): train-mode dropout (stochastic masking) not implemented; eval semantics only.


def refine_transformer_decoder_layer(params, frame_emb, query_emb, *, n_heads=4, eps=1e-5):
    """frame_emb: [B, Nf, D], query_emb: [B, Nq, D] -> (out [B, Nf, D], attn_w [B, Nf, Nq])."""
    B, Nf, D = frame_emb.shape
    Nq = query_emb.shape[1]
    assert D % n_heads == 0

    row = lambda a: a.reshape(1, -1)
    w_spec = lambda shape: pl.BlockSpec(shape, lambda b: (0, 0))   # weight: resident, fetched once

    kernel = functools.partial(_refine_layer_kernel, n_heads=n_heads, eps=eps)
    return pl.pallas_call(
        kernel,
        out_shape=(jax.ShapeDtypeStruct((B, Nf, D), jnp.float32),
                   jax.ShapeDtypeStruct((B, Nf, Nq), jnp.float32)),
        grid=(B,),
        in_specs=[
            pl.BlockSpec((1, Nf, D), lambda b: (b, 0, 0)),   # frame_emb
            pl.BlockSpec((1, Nq, D), lambda b: (b, 0, 0)),   # query_emb
            w_spec((D, D)), w_spec((1, D)),                  # wq, bq
            w_spec((D, 2 * D)), w_spec((1, 2 * D)),          # wkv (K|V fused), bkv
            w_spec((D, D)), w_spec((1, D)),                  # wo, bo
            w_spec((1, D)), w_spec((1, D)),                  # norm1 gamma/beta
            w_spec((D, D)), w_spec((1, D)),                  # ffn linear
            w_spec((1, D)), w_spec((1, D)),                  # ffn LayerNorm gamma/beta
        ],
        out_specs=[
            pl.BlockSpec((1, Nf, D), lambda b: (b, 0, 0)),
            pl.BlockSpec((1, Nf, Nq), lambda b: (b, 0, 0)),
        ],
        compiler_params=pltpu.CompilerParams(dimension_semantics=("parallel",)),
    )(frame_emb, query_emb,
      params["wq"], row(params["bq"]),
      params["wkv"], row(params["bkv"]),
      params["wo"], row(params["bo"]),
      row(params["norm1_g"]), row(params["norm1_b"]),
      params["ffn_w"], row(params["ffn_b"]),
      row(params["norm2_g"]), row(params["norm2_b"]))


# ----------------------------------------------------------------------------
# Pure-JAX reference (mirrors the PyTorch forward in eval mode)
# ----------------------------------------------------------------------------
def reference(params, frame_emb, query_emb, *, n_heads=4, eps=1e-5):
    B, Nf, D = frame_emb.shape
    Nq = query_emb.shape[1]
    dh = D // n_heads
    q = frame_emb @ params["wq"] + params["bq"]
    kv = query_emb @ params["wkv"] + params["bkv"]
    k, v = kv[..., :D], kv[..., D:]
    qh = q.reshape(B, Nf, n_heads, dh).transpose(0, 2, 1, 3)
    kh = k.reshape(B, Nq, n_heads, dh).transpose(0, 2, 1, 3)
    vh = v.reshape(B, Nq, n_heads, dh).transpose(0, 2, 1, 3)
    s = jnp.einsum("bhfd,bhqd->bhfq", qh, kh) / jnp.sqrt(float(dh))
    p = jax.nn.softmax(s, axis=-1)
    attn_w = jnp.mean(p, axis=1)
    o = jnp.einsum("bhfq,bhqd->bhfd", p, vh).transpose(0, 2, 1, 3).reshape(B, Nf, D)
    attn_out = o @ params["wo"] + params["bo"]

    def ln(x, g, b):
        mu = x.mean(-1, keepdims=True)
        c = x - mu
        var = (c * c).mean(-1, keepdims=True)
        return c * jax.lax.rsqrt(var + eps) * g + b

    h = ln(frame_emb + attn_out, params["norm1_g"], params["norm1_b"])
    y = h @ params["ffn_w"] + params["ffn_b"]
    return ln(y, params["norm2_g"], params["norm2_b"]), attn_w


# ----------------------------------------------------------------------------
# Deterministic example
# ----------------------------------------------------------------------------
if __name__ == "__main__":
    B, Nf, Nq, D = 2, 16, 128, 128      # lane-dense: D and Nq are full 128-lane vregs
    n_heads = 4

    key = jax.random.PRNGKey(0)
    ks = jax.random.split(key, 8)
    w = lambda k, s, sc=0.05: (sc * jax.random.normal(k, s)).astype(jnp.float32)
    params = {
        "wq": w(ks[0], (D, D)), "bq": jnp.zeros((D,), jnp.float32),
        "wkv": w(ks[1], (D, 2 * D)), "bkv": jnp.zeros((2 * D,), jnp.float32),
        "wo": w(ks[2], (D, D)), "bo": jnp.zeros((D,), jnp.float32),
        "norm1_g": jnp.ones((D,), jnp.float32), "norm1_b": jnp.zeros((D,), jnp.float32),
        "ffn_w": w(ks[3], (D, D)), "ffn_b": jnp.zeros((D,), jnp.float32),
        "norm2_g": jnp.ones((D,), jnp.float32), "norm2_b": jnp.zeros((D,), jnp.float32),
    }
    frame_emb = jax.random.normal(ks[4], (B, Nf, D), jnp.float32)
    query_emb = jax.random.normal(ks[5], (B, Nq, D), jnp.float32)

    out, attn_w = refine_transformer_decoder_layer(
        params, frame_emb, query_emb, n_heads=n_heads)
    jax.block_until_ready((out, attn_w))

    ref_out, ref_w = reference(params, frame_emb, query_emb, n_heads=n_heads)
    assert out.shape == (B, Nf, D) and attn_w.shape == (B, Nf, Nq)
    assert bool(jnp.all(jnp.isfinite(out))) and bool(jnp.all(jnp.isfinite(attn_w)))
    # generous tolerance: pl.reciprocal(approx=True) softmax denominator (~1e-3 rel. error)
    assert bool(jnp.allclose(out, ref_out, atol=5e-2, rtol=5e-2))
    assert bool(jnp.allclose(attn_w, ref_w, atol=5e-3, rtol=5e-2))
    print("KERNEL_OK")
</pallas_src>

<mosaic_0001>
module attributes {stable_mosaic.version = 11 : i64} {
  func.func @_refine_layer_kernel(%arg0: i32, %arg1: memref<1x16x128xf32, #tpu.memory_space<vmem>>, %arg2: memref<1x128x128xf32, #tpu.memory_space<vmem>>, %arg3: memref<128x128xf32, #tpu.memory_space<vmem>>, %arg4: memref<1x128xf32, #tpu.memory_space<vmem>>, %arg5: memref<128x256xf32, #tpu.memory_space<vmem>>, %arg6: memref<1x256xf32, #tpu.memory_space<vmem>>, %arg7: memref<128x128xf32, #tpu.memory_space<vmem>>, %arg8: memref<1x128xf32, #tpu.memory_space<vmem>>, %arg9: memref<1x128xf32, #tpu.memory_space<vmem>>, %arg10: memref<1x128xf32, #tpu.memory_space<vmem>>, %arg11: memref<128x128xf32, #tpu.memory_space<vmem>>, %arg12: memref<1x128xf32, #tpu.memory_space<vmem>>, %arg13: memref<1x128xf32, #tpu.memory_space<vmem>>, %arg14: memref<1x128xf32, #tpu.memory_space<vmem>>, %arg15: memref<1x16x128xf32, #tpu.memory_space<vmem>>, %arg16: memref<1x16x128xf32, #tpu.memory_space<vmem>>) attributes {dimension_semantics = [#tpu.dimension_semantics<parallel>], iteration_bounds = array<i64: 2>, scalar_prefetch = 0 : i64, scratch_operands = 0 : i64, tpu.core_type = #tpu.core_type<tc>, window_params = [{transform_indices = @transform_0, window_bounds = array<i64: 1, 16, 128>}, {transform_indices = @transform_1, window_bounds = array<i64: 1, 128, 128>}, {pipeline_mode = #tpu.pipeline_mode<synchronous>, transform_indices = @transform_2, window_bounds = array<i64: 128, 128>}, {pipeline_mode = #tpu.pipeline_mode<synchronous>, transform_indices = @transform_3, window_bounds = array<i64: 1, 128>}, {pipeline_mode = #tpu.pipeline_mode<synchronous>, transform_indices = @transform_4, window_bounds = array<i64: 128, 256>}, {pipeline_mode = #tpu.pipeline_mode<synchronous>, transform_indices = @transform_5, window_bounds = array<i64: 1, 256>}, {pipeline_mode = #tpu.pipeline_mode<synchronous>, transform_indices = @transform_6, window_bounds = array<i64: 128, 128>}, {pipeline_mode = #tpu.pipeline_mode<synchronous>, transform_indices = @transform_7, window_bounds = array<i64: 1, 128>}, {pipeline_mode = #tpu.pipeline_mode<synchronous>, transform_indices = @transform_8, window_bounds = array<i64: 1, 128>}, {pipeline_mode = #tpu.pipeline_mode<synchronous>, transform_indices = @transform_9, window_bounds = array<i64: 1, 128>}, {pipeline_mode = #tpu.pipeline_mode<synchronous>, transform_indices = @transform_10, window_bounds = array<i64: 128, 128>}, {pipeline_mode = #tpu.pipeline_mode<synchronous>, transform_indices = @transform_11, window_bounds = array<i64: 1, 128>}, {pipeline_mode = #tpu.pipeline_mode<synchronous>, transform_indices = @transform_12, window_bounds = array<i64: 1, 128>}, {pipeline_mode = #tpu.pipeline_mode<synchronous>, transform_indices = @transform_13, window_bounds = array<i64: 1, 128>}, {transform_indices = @transform_14, window_bounds = array<i64: 1, 16, 128>}, {transform_indices = @transform_15, window_bounds = array<i64: 1, 16, 128>}]} {
    %c0 = arith.constant 0 : index
    %c0_0 = arith.constant 0 : index
    %c0_1 = arith.constant 0 : index
    %0 = vector.load %arg1[%c0, %c0_0, %c0_1] : memref<1x16x128xf32, #tpu.memory_space<vmem>>, vector<1x16x128xf32>
    %1 = vector.shape_cast %0 : vector<1x16x128xf32> to vector<16x128xf32>
    %c0_2 = arith.constant 0 : index
    %c0_3 = arith.constant 0 : index
    %c0_4 = arith.constant 0 : index
    %2 = vector.load %arg2[%c0_2, %c0_3, %c0_4] : memref<1x128x128xf32, #tpu.memory_space<vmem>>, vector<1x128x128xf32>
    %3 = vector.shape_cast %2 : vector<1x128x128xf32> to vector<128x128xf32>
    %c0_5 = arith.constant 0 : index
    %c0_6 = arith.constant 0 : index
    %4 = vector.load %arg3[%c0_5, %c0_6] : memref<128x128xf32, #tpu.memory_space<vmem>>, vector<128x128xf32>
    %cst = arith.constant dense<0.000000e+00> : vector<16x128xf32>
    %5 = tpu.matmul %1, %4, %cst {dimension_numbers = #tpu.dot_dimension_numbers<[1], [0], [0], [1], [0, 0, 1, 1], [], []>} : vector<16x128xf32>, vector<128x128xf32>, vector<16x128xf32> -> vector<16x128xf32>
    %c0_7 = arith.constant 0 : index
    %c0_8 = arith.constant 0 : index
    %6 = vector.load %arg4[%c0_7, %c0_8] : memref<1x128xf32, #tpu.memory_space<vmem>>, vector<1x128xf32>
    %7 = vector.broadcast %6 : vector<1x128xf32> to vector<16x128xf32>
    %8 = arith.addf %5, %7 : vector<16x128xf32>
    %c0_9 = arith.constant 0 : index
    %c0_10 = arith.constant 0 : index
    %9 = vector.load %arg5[%c0_9, %c0_10] : memref<128x256xf32, #tpu.memory_space<vmem>>, vector<128x256xf32>
    %cst_11 = arith.constant dense<0.000000e+00> : vector<128x256xf32>
    %10 = tpu.matmul %3, %9, %cst_11 {dimension_numbers = #tpu.dot_dimension_numbers<[1], [0], [0], [1], [0, 0, 1, 1], [], []>} : vector<128x128xf32>, vector<128x256xf32>, vector<128x256xf32> -> vector<128x256xf32>
    %c0_12 = arith.constant 0 : index
    %c0_13 = arith.constant 0 : index
    %11 = vector.load %arg6[%c0_12, %c0_13] : memref<1x256xf32, #tpu.memory_space<vmem>>, vector<1x256xf32>
    %12 = vector.broadcast %11 : vector<1x256xf32> to vector<128x256xf32>
    %13 = arith.addf %10, %12 : vector<128x256xf32>
    %14 = vector.extract_strided_slice %13 {offsets = [0, 0], sizes = [128, 128], strides = [1, 1]} : vector<128x256xf32> to vector<128x128xf32>
    %15 = vector.extract_strided_slice %13 {offsets = [0, 128], sizes = [128, 128], strides = [1, 1]} : vector<128x256xf32> to vector<128x128xf32>
    %16 = vector.extract_strided_slice %8 {offsets = [0, 0], sizes = [16, 32], strides = [1, 1]} : vector<16x128xf32> to vector<16x32xf32>
    %17 = vector.extract_strided_slice %14 {offsets = [0, 0], sizes = [128, 32], strides = [1, 1]} : vector<128x128xf32> to vector<128x32xf32>
    %cst_14 = arith.constant dense<0.000000e+00> : vector<16x128xf32>
    %18 = tpu.matmul %16, %17, %cst_14 {dimension_numbers = #tpu.dot_dimension_numbers<[1], [1], [0], [0], [0, 0, 1, 0], [], []>} : vector<16x32xf32>, vector<128x32xf32>, vector<16x128xf32> -> vector<16x128xf32>
    %cst_15 = arith.constant 0.176776692 : f32
    %19 = vector.broadcast %cst_15 : f32 to vector<16x128xf32>
    %20 = arith.mulf %18, %19 : vector<16x128xf32>
    %cst_16 = arith.constant dense<0xFF800000> : vector<16xf32>
    %21 = vector.multi_reduction <maximumf>, %20, %cst_16 [1] : vector<16x128xf32> to vector<16xf32>
    %22 = vector.shape_cast %21 : vector<16xf32> to vector<16x1xf32>
    %23 = vector.broadcast %22 : vector<16x1xf32> to vector<16x128xf32>
    %24 = arith.subf %20, %23 : vector<16x128xf32>
    %25 = math.exp %24 : vector<16x128xf32>
    %cst_17 = arith.constant dense<0.000000e+00> : vector<16xf32>
    %26 = vector.multi_reduction <add>, %25, %cst_17 [1] : vector<16x128xf32> to vector<16xf32>
    %27 = vector.shape_cast %26 : vector<16xf32> to vector<16x1xf32>
    %28 = tpu.reciprocal %27 {approx = true} : vector<16x1xf32> -> vector<16x1xf32>
    %29 = vector.broadcast %28 : vector<16x1xf32> to vector<16x128xf32>
    %30 = arith.mulf %25, %29 : vector<16x128xf32>
    %31 = vector.extract_strided_slice %15 {offsets = [0, 0], sizes = [128, 32], strides = [1, 1]} : vector<128x128xf32> to vector<128x32xf32>
    %cst_18 = arith.constant dense<0.000000e+00> : vector<16x32xf32>
    %32 = tpu.matmul %30, %31, %cst_18 {dimension_numbers = #tpu.dot_dimension_numbers<[1], [0], [0], [1], [0, 0, 1, 1], [], []>} : vector<16x128xf32>, vector<128x32xf32>, vector<16x32xf32> -> vector<16x32xf32>
    %33 = vector.extract_strided_slice %8 {offsets = [0, 32], sizes = [16, 32], strides = [1, 1]} : vector<16x128xf32> to vector<16x32xf32>
    %34 = vector.extract_strided_slice %14 {offsets = [0, 32], sizes = [128, 32], strides = [1, 1]} : vector<128x128xf32> to vector<128x32xf32>
    %cst_19 = arith.constant dense<0.000000e+00> : vector<16x128xf32>
    %35 = tpu.matmul %33, %34, %cst_19 {dimension_numbers = #tpu.dot_dimension_numbers<[1], [1], [0], [0], [0, 0, 1, 0], [], []>} : vector<16x32xf32>, vector<128x32xf32>, vector<16x128xf32> -> vector<16x128xf32>
    %cst_20 = arith.constant 0.176776692 : f32
    %36 = vector.broadcast %cst_20 : f32 to vector<16x128xf32>
    %37 = arith.mulf %35, %36 : vector<16x128xf32>
    %cst_21 = arith.constant dense<0xFF800000> : vector<16xf32>
    %38 = vector.multi_reduction <maximumf>, %37, %cst_21 [1] : vector<16x128xf32> to vector<16xf32>
    %39 = vector.shape_cast %38 : vector<16xf32> to vector<16x1xf32>
    %40 = vector.broadcast %39 : vector<16x1xf32> to vector<16x128xf32>
    %41 = arith.subf %37, %40 : vector<16x128xf32>
    %42 = math.exp %41 : vector<16x128xf32>
    %cst_22 = arith.constant dense<0.000000e+00> : vector<16xf32>
    %43 = vector.multi_reduction <add>, %42, %cst_22 [1] : vector<16x128xf32> to vector<16xf32>
    %44 = vector.shape_cast %43 : vector<16xf32> to vector<16x1xf32>
    %45 = tpu.reciprocal %44 {approx = true} : vector<16x1xf32> -> vector<16x1xf32>
    %46 = vector.broadcast %45 : vector<16x1xf32> to vector<16x128xf32>
    %47 = arith.mulf %42, %46 : vector<16x128xf32>
    %48 = arith.addf %30, %47 : vector<16x128xf32>
    %49 = vector.extract_strided_slice %15 {offsets = [0, 32], sizes = [128, 32], strides = [1, 1]} : vector<128x128xf32> to vector<128x32xf32>
    %cst_23 = arith.constant dense<0.000000e+00> : vector<16x32xf32>
    %50 = tpu.matmul %47, %49, %cst_23 {dimension_numbers = #tpu.dot_dimension_numbers<[1], [0], [0], [1], [0, 0, 1, 1], [], []>} : vector<16x128xf32>, vector<128x32xf32>, vector<16x32xf32> -> vector<16x32xf32>
    %51 = vector.extract_strided_slice %8 {offsets = [0, 64], sizes = [16, 32], strides = [1, 1]} : vector<16x128xf32> to vector<16x32xf32>
    %52 = vector.extract_strided_slice %14 {offsets = [0, 64], sizes = [128, 32], strides = [1, 1]} : vector<128x128xf32> to vector<128x32xf32>
    %cst_24 = arith.constant dense<0.000000e+00> : vector<16x128xf32>
    %53 = tpu.matmul %51, %52, %cst_24 {dimension_numbers = #tpu.dot_dimension_numbers<[1], [1], [0], [0], [0, 0, 1, 0], [], []>} : vector<16x32xf32>, vector<128x32xf32>, vector<16x128xf32> -> vector<16x128xf32>
    %cst_25 = arith.constant 0.176776692 : f32
    %54 = vector.broadcast %cst_25 : f32 to vector<16x128xf32>
    %55 = arith.mulf %53, %54 : vector<16x128xf32>
    %cst_26 = arith.constant dense<0xFF800000> : vector<16xf32>
    %56 = vector.multi_reduction <maximumf>, %55, %cst_26 [1] : vector<16x128xf32> to vector<16xf32>
    %57 = vector.shape_cast %56 : vector<16xf32> to vector<16x1xf32>
    %58 = vector.broadcast %57 : vector<16x1xf32> to vector<16x128xf32>
    %59 = arith.subf %55, %58 : vector<16x128xf32>
    %60 = math.exp %59 : vector<16x128xf32>
    %cst_27 = arith.constant dense<0.000000e+00> : vector<16xf32>
    %61 = vector.multi_reduction <add>, %60, %cst_27 [1] : vector<16x128xf32> to vector<16xf32>
    %62 = vector.shape_cast %61 : vector<16xf32> to vector<16x1xf32>
    %63 = tpu.reciprocal %62 {approx = true} : vector<16x1xf32> -> vector<16x1xf32>
    %64 = vector.broadcast %63 : vector<16x1xf32> to vector<16x128xf32>
    %65 = arith.mulf %60, %64 : vector<16x128xf32>
    %66 = arith.addf %48, %65 : vector<16x128xf32>
    %67 = vector.extract_strided_slice %15 {offsets = [0, 64], sizes = [128, 32], strides = [1, 1]} : vector<128x128xf32> to vector<128x32xf32>
    %cst_28 = arith.constant dense<0.000000e+00> : vector<16x32xf32>
    %68 = tpu.matmul %65, %67, %cst_28 {dimension_numbers = #tpu.dot_dimension_numbers<[1], [0], [0], [1], [0, 0, 1, 1], [], []>} : vector<16x128xf32>, vector<128x32xf32>, vector<16x32xf32> -> vector<16x32xf32>
    %69 = vector.extract_strided_slice %8 {offsets = [0, 96], sizes = [16, 32], strides = [1, 1]} : vector<16x128xf32> to vector<16x32xf32>
    %70 = vector.extract_strided_slice %14 {offsets = [0, 96], sizes = [128, 32], strides = [1, 1]} : vector<128x128xf32> to vector<128x32xf32>
    %cst_29 = arith.constant dense<0.000000e+00> : vector<16x128xf32>
    %71 = tpu.matmul %69, %70, %cst_29 {dimension_numbers = #tpu.dot_dimension_numbers<[1], [1], [0], [0], [0, 0, 1, 0], [], []>} : vector<16x32xf32>, vector<128x32xf32>, vector<16x128xf32> -> vector<16x128xf32>
    %cst_30 = arith.constant 0.176776692 : f32
    %72 = vector.broadcast %cst_30 : f32 to vector<16x128xf32>
    %73 = arith.mulf %71, %72 : vector<16x128xf32>
    %cst_31 = arith.constant dense<0xFF800000> : vector<16xf32>
    %74 = vector.multi_reduction <maximumf>, %73, %cst_31 [1] : vector<16x128xf32> to vector<16xf32>
    %75 = vector.shape_cast %74 : vector<16xf32> to vector<16x1xf32>
    %76 = vector.broadcast %75 : vector<16x1xf32> to vector<16x128xf32>
    %77 = arith.subf %73, %76 : vector<16x128xf32>
    %78 = math.exp %77 : vector<16x128xf32>
    %cst_32 = arith.constant dense<0.000000e+00> : vector<16xf32>
    %79 = vector.multi_reduction <add>, %78, %cst_32 [1] : vector<16x128xf32> to vector<16xf32>
    %80 = vector.shape_cast %79 : vector<16xf32> to vector<16x1xf32>
    %81 = tpu.reciprocal %80 {approx = true} : vector<16x1xf32> -> vector<16x1xf32>
    %82 = vector.broadcast %81 : vector<16x1xf32> to vector<16x128xf32>
    %83 = arith.mulf %78, %82 : vector<16x128xf32>
    %84 = arith.addf %66, %83 : vector<16x128xf32>
    %85 = vector.extract_strided_slice %15 {offsets = [0, 96], sizes = [128, 32], strides = [1, 1]} : vector<128x128xf32> to vector<128x32xf32>
    %cst_33 = arith.constant dense<0.000000e+00> : vector<16x32xf32>
    %86 = tpu.matmul %83, %85, %cst_33 {dimension_numbers = #tpu.dot_dimension_numbers<[1], [0], [0], [1], [0, 0, 1, 1], [], []>} : vector<16x128xf32>, vector<128x32xf32>, vector<16x32xf32> -> vector<16x32xf32>
    %cst_34 = arith.constant 2.500000e-01 : f32
    %87 = vector.broadcast %cst_34 : f32 to vector<16x128xf32>
    %88 = arith.mulf %84, %87 : vector<16x128xf32>
    %c0_35 = arith.constant 0 : index
    %c0_36 = arith.constant 0 : index
    %c0_37 = arith.constant 0 : index
    %89 = vector.load %arg16[%c0_35, %c0_36, %c0_37] : memref<1x16x128xf32, #tpu.memory_space<vmem>>, vector<1x16x128xf32>
    %90 = vector.shape_cast %89 : vector<1x16x128xf32> to vector<16x128xf32>
    %91 = vector.shape_cast %88 : vector<16x128xf32> to vector<1x16x128xf32>
    tpu.vector_store %arg16[%c0_35, %c0_36, %c0_37], %91 {strides = array<i32>} : memref<1x16x128xf32, #tpu.memory_space<vmem>>, vector<1x16x128xf32>,
    %92 = tpu.concatenate %32, %50, %68, %86 in 1 : vector<16x32xf32>, vector<16x32xf32>, vector<16x32xf32>, vector<16x32xf32> -> vector<16x128xf32>
    %c0_38 = arith.constant 0 : index
    %c0_39 = arith.constant 0 : index
    %93 = vector.load %arg7[%c0_38, %c0_39] : memref<128x128xf32, #tpu.memory_space<vmem>>, vector<128x128xf32>
    %cst_40 = arith.constant dense<0.000000e+00> : vector<16x128xf32>
    %94 = tpu.matmul %92, %93, %cst_40 {dimension_numbers = #tpu.dot_dimension_numbers<[1], [0], [0], [1], [0, 0, 1, 1], [], []>} : vector<16x128xf32>, vector<128x128xf32>, vector<16x128xf32> -> vector<16x128xf32>
    %c0_41 = arith.constant 0 : index
    %c0_42 = arith.constant 0 : index
    %95 = vector.load %arg8[%c0_41, %c0_42] : memref<1x128xf32, #tpu.memory_space<vmem>>, vector<1x128xf32>
    %96 = vector.broadcast %95 : vector<1x128xf32> to vector<16x128xf32>
    %97 = arith.addf %94, %96 : vector<16x128xf32>
    %98 = arith.addf %1, %97 : vector<16x128xf32>
    %c0_43 = arith.constant 0 : index
    %c0_44 = arith.constant 0 : index
    %99 = vector.load %arg9[%c0_43, %c0_44] : memref<1x128xf32, #tpu.memory_space<vmem>>, vector<1x128xf32>
    %c0_45 = arith.constant 0 : index
    %c0_46 = arith.constant 0 : index
    %100 = vector.load %arg10[%c0_45, %c0_46] : memref<1x128xf32, #tpu.memory_space<vmem>>, vector<1x128xf32>
    %cst_47 = arith.constant dense<0.000000e+00> : vector<16xf32>
    %101 = vector.multi_reduction <add>, %98, %cst_47 [1] : vector<16x128xf32> to vector<16xf32>
    %102 = vector.shape_cast %101 : vector<16xf32> to vector<16x1xf32>
    %cst_48 = arith.constant 1.280000e+02 : f32
    %103 = vector.broadcast %cst_48 : f32 to vector<16x1xf32>
    %104 = arith.divf %102, %103 : vector<16x1xf32>
    %105 = vector.broadcast %104 : vector<16x1xf32> to vector<16x128xf32>
    %106 = arith.subf %98, %105 : vector<16x128xf32>
    %107 = arith.mulf %106, %106 : vector<16x128xf32>
    %cst_49 = arith.constant dense<0.000000e+00> : vector<16xf32>
    %108 = vector.multi_reduction <add>, %107, %cst_49 [1] : vector<16x128xf32> to vector<16xf32>
    %109 = vector.shape_cast %108 : vector<16xf32> to vector<16x1xf32>
    %cst_50 = arith.constant 1.280000e+02 : f32
    %110 = vector.broadcast %cst_50 : f32 to vector<16x1xf32>
    %111 = arith.divf %109, %110 : vector<16x1xf32>
    %cst_51 = arith.constant 9.99999974E-6 : f32
    %112 = vector.broadcast %cst_51 : f32 to vector<16x1xf32>
    %113 = arith.addf %111, %112 : vector<16x1xf32>
    %114 = math.rsqrt %113 : vector<16x1xf32>
    %115 = vector.broadcast %114 : vector<16x1xf32> to vector<16x128xf32>
    %116 = arith.mulf %106, %115 : vector<16x128xf32>
    %117 = vector.broadcast %99 : vector<1x128xf32> to vector<16x128xf32>
    %118 = arith.mulf %116, %117 : vector<16x128xf32>
    %119 = vector.broadcast %100 : vector<1x128xf32> to vector<16x128xf32>
    %120 = arith.addf %118, %119 : vector<16x128xf32>
    %c0_52 = arith.constant 0 : index
    %c0_53 = arith.constant 0 : index
    %121 = vector.load %arg11[%c0_52, %c0_53] : memref<128x128xf32, #tpu.memory_space<vmem>>, vector<128x128xf32>
    %cst_54 = arith.constant dense<0.000000e+00> : vector<16x128xf32>
    %122 = tpu.matmul %120, %121, %cst_54 {dimension_numbers = #tpu.dot_dimension_numbers<[1], [0], [0], [1], [0, 0, 1, 1], [], []>} : vector<16x128xf32>, vector<128x128xf32>, vector<16x128xf32> -> vector<16x128xf32>
    %c0_55 = arith.constant 0 : index
    %c0_56 = arith.constant 0 : index
    %123 = vector.load %arg12[%c0_55, %c0_56] : memref<1x128xf32, #tpu.memory_space<vmem>>, vector<1x128xf32>
    %124 = vector.broadcast %123 : vector<1x128xf32> to vector<16x128xf32>
    %125 = arith.addf %122, %124 : vector<16x128xf32>
    %c0_57 = arith.constant 0 : index
    %c0_58 = arith.constant 0 : index
    %126 = vector.load %arg13[%c0_57, %c0_58] : memref<1x128xf32, #tpu.memory_space<vmem>>, vector<1x128xf32>
    %c0_59 = arith.constant 0 : index
    %c0_60 = arith.constant 0 : index
    %127 = vector.load %arg14[%c0_59, %c0_60] : memref<1x128xf32, #tpu.memory_space<vmem>>, vector<1x128xf32>
    %cst_61 = arith.constant dense<0.000000e+00> : vector<16xf32>
    %128 = vector.multi_reduction <add>, %125, %cst_61 [1] : vector<16x128xf32> to vector<16xf32>
    %129 = vector.shape_cast %128 : vector<16xf32> to vector<16x1xf32>
    %cst_62 = arith.constant 1.280000e+02 : f32
    %130 = vector.broadcast %cst_62 : f32 to vector<16x1xf32>
    %131 = arith.divf %129, %130 : vector<16x1xf32>
    %132 = vector.broadcast %131 : vector<16x1xf32> to vector<16x128xf32>
    %133 = arith.subf %125, %132 : vector<16x128xf32>
    %134 = arith.mulf %133, %133 : vector<16x128xf32>
    %cst_63 = arith.constant dense<0.000000e+00> : vector<16xf32>
    %135 = vector.multi_reduction <add>, %134, %cst_63 [1] : vector<16x128xf32> to vector<16xf32>
    %136 = vector.shape_cast %135 : vector<16xf32> to vector<16x1xf32>
    %cst_64 = arith.constant 1.280000e+02 : f32
    %137 = vector.broadcast %cst_64 : f32 to vector<16x1xf32>
    %138 = arith.divf %136, %137 : vector<16x1xf32>
    %cst_65 = arith.constant 9.99999974E-6 : f32
    %139 = vector.broadcast %cst_65 : f32 to vector<16x1xf32>
    %140 = arith.addf %138, %139 : vector<16x1xf32>
    %141 = math.rsqrt %140 : vector<16x1xf32>
    %142 = vector.broadcast %141 : vector<16x1xf32> to vector<16x128xf32>
    %143 = arith.mulf %133, %142 : vector<16x128xf32>
    %144 = vector.broadcast %126 : vector<1x128xf32> to vector<16x128xf32>
    %145 = arith.mulf %143, %144 : vector<16x128xf32>
    %146 = vector.broadcast %127 : vector<1x128xf32> to vector<16x128xf32>
    %147 = arith.addf %145, %146 : vector<16x128xf32>
    %c0_66 = arith.constant 0 : index
    %c0_67 = arith.constant 0 : index
    %c0_68 = arith.constant 0 : index
    %148 = vector.load %arg15[%c0_66, %c0_67, %c0_68] : memref<1x16x128xf32, #tpu.memory_space<vmem>>, vector<1x16x128xf32>
    %149 = vector.shape_cast %148 : vector<1x16x128xf32> to vector<16x128xf32>
    %150 = vector.shape_cast %147 : vector<16x128xf32> to vector<1x16x128xf32>
    tpu.vector_store %arg15[%c0_66, %c0_67, %c0_68], %150 {strides = array<i32>} : memref<1x16x128xf32, #tpu.memory_space<vmem>>, vector<1x16x128xf32>,
    return
  }
  func.func @transform_0(%arg0: i32) -> (i32, i32, i32) {
    %c0_i32 = arith.constant 0 : i32
    %c0_i32_0 = arith.constant 0 : i32
    %c0_i32_1 = arith.constant 0 : i32
    return %arg0, %c0_i32, %c0_i32_0 : i32, i32, i32
  }
  func.func @transform_1(%arg0: i32) -> (i32, i32, i32) {
    %c0_i32 = arith.constant 0 : i32
    %c0_i32_0 = arith.constant 0 : i32
    %c0_i32_1 = arith.constant 0 : i32
    return %arg0, %c0_i32, %c0_i32_0 : i32, i32, i32
  }
  func.func @transform_2(%arg0: i32) -> (i32, i32) {
    %c0_i32 = arith.constant 0 : i32
    %c0_i32_0 = arith.constant 0 : i32
    %c0_i32_1 = arith.constant 0 : i32
    return %c0_i32, %c0_i32_0 : i32, i32
  }
  func.func @transform_3(%arg0: i32) -> (i32, i32) {
    %c0_i32 = arith.constant 0 : i32
    %c0_i32_0 = arith.constant 0 : i32
    %c0_i32_1 = arith.constant 0 : i32
    return %c0_i32, %c0_i32_0 : i32, i32
  }
  func.func @transform_4(%arg0: i32) -> (i32, i32) {
    %c0_i32 = arith.constant 0 : i32
    %c0_i32_0 = arith.constant 0 : i32
    %c0_i32_1 = arith.constant 0 : i32
    return %c0_i32, %c0_i32_0 : i32, i32
  }
  func.func @transform_5(%arg0: i32) -> (i32, i32) {
    %c0_i32 = arith.constant 0 : i32
    %c0_i32_0 = arith.constant 0 : i32
    %c0_i32_1 = arith.constant 0 : i32
    return %c0_i32, %c0_i32_0 : i32, i32
  }
  func.func @transform_6(%arg0: i32) -> (i32, i32) {
    %c0_i32 = arith.constant 0 : i32
    %c0_i32_0 = arith.constant 0 : i32
    %c0_i32_1 = arith.constant 0 : i32
    return %c0_i32, %c0_i32_0 : i32, i32
  }
  func.func @transform_7(%arg0: i32) -> (i32, i32) {
    %c0_i32 = arith.constant 0 : i32
    %c0_i32_0 = arith.constant 0 : i32
    %c0_i32_1 = arith.constant 0 : i32
    return %c0_i32, %c0_i32_0 : i32, i32
  }
  func.func @transform_8(%arg0: i32) -> (i32, i32) {
    %c0_i32 = arith.constant 0 : i32
    %c0_i32_0 = arith.constant 0 : i32
    %c0_i32_1 = arith.constant 0 : i32
    return %c0_i32, %c0_i32_0 : i32, i32
  }
  func.func @transform_9(%arg0: i32) -> (i32, i32) {
    %c0_i32 = arith.constant 0 : i32
    %c0_i32_0 = arith.constant 0 : i32
    %c0_i32_1 = arith.constant 0 : i32
    return %c0_i32, %c0_i32_0 : i32, i32
  }
  func.func @transform_10(%arg0: i32) -> (i32, i32) {
    %c0_i32 = arith.constant 0 : i32
    %c0_i32_0 = arith.constant 0 : i32
    %c0_i32_1 = arith.constant 0 : i32
    return %c0_i32, %c0_i32_0 : i32, i32
  }
  func.func @transform_11(%arg0: i32) -> (i32, i32) {
    %c0_i32 = arith.constant 0 : i32
    %c0_i32_0 = arith.constant 0 : i32
    %c0_i32_1 = arith.constant 0 : i32
    return %c0_i32, %c0_i32_0 : i32, i32
  }
  func.func @transform_12(%arg0: i32) -> (i32, i32) {
    %c0_i32 = arith.constant 0 : i32
    %c0_i32_0 = arith.constant 0 : i32
    %c0_i32_1 = arith.constant 0 : i32
    return %c0_i32, %c0_i32_0 : i32, i32
  }
  func.func @transform_13(%arg0: i32) -> (i32, i32) {
    %c0_i32 = arith.constant 0 : i32
    %c0_i32_0 = arith.constant 0 : i32
    %c0_i32_1 = arith.constant 0 : i32
    return %c0_i32, %c0_i32_0 : i32, i32
  }
  func.func @transform_14(%arg0: i32) -> (i32, i32, i32) {
    %c0_i32 = arith.constant 0 : i32
    %c0_i32_0 = arith.constant 0 : i32
    %c0_i32_1 = arith.constant 0 : i32
    return %arg0, %c0_i32, %c0_i32_0 : i32, i32, i32
  }
  func.func @transform_15(%arg0: i32) -> (i32, i32, i32) {
    %c0_i32 = arith.constant 0 : i32
    %c0_i32_0 = arith.constant 0 : i32
    %c0_i32_1 = arith.constant 0 : i32
    return %arg0, %c0_i32, %c0_i32_0 : i32, i32, i32
  }
}

</mosaic_0001>

<llo_original>
// kernel: tpu_custom_call.1
$region0: #{tpu_custom_call.1}
  #allocation0 [shape = 'u32[]', space=smem, size = 0x4, offset = 0x4, fixed_abs, tag = 'smem constant byte address 0x4 - core index']
  #allocation1 [shape = 'u32[144,128]{1,0:T(1,128)}', space=vmem, size = 0x12000, scoped, tag = 'internal scratch']
  %s0 = inlined_call_operand.hbm [shape: f32[2,16,128], index: 0, kind: input, shape index: {}]
  %s1 = inlined_call_operand.hbm [shape: f32[2,128,128], index: 1, kind: input, shape index: {}]
  %s2 = inlined_call_operand.hbm [shape: f32[128,128], index: 2, kind: input, shape index: {}]
  %s3 = inlined_call_operand.vmem [shape: f32[1,128], index: 3, kind: input, shape index: {}]
  %s4 = inlined_call_operand.hbm [shape: f32[128,256], index: 4, kind: input, shape index: {}]
  %s5 = inlined_call_operand.vmem [shape: f32[1,256], index: 5, kind: input, shape index: {}]
  %s6 = inlined_call_operand.hbm [shape: f32[128,128], index: 6, kind: input, shape index: {}]
  %s7 = inlined_call_operand.vmem [shape: f32[1,128], index: 7, kind: input, shape index: {}]
  %s8 = inlined_call_operand.vmem [shape: f32[1,128], index: 8, kind: input, shape index: {}]
  %s9 = inlined_call_operand.vmem [shape: f32[1,128], index: 9, kind: input, shape index: {}]
  %s10 = inlined_call_operand.hbm [shape: f32[128,128], index: 10, kind: input, shape index: {}]
  %s11 = inlined_call_operand.vmem [shape: f32[1,128], index: 11, kind: input, shape index: {}]
  %s12 = inlined_call_operand.vmem [shape: f32[1,128], index: 12, kind: input, shape index: {}]
  %s13 = inlined_call_operand.vmem [shape: f32[1,128], index: 13, kind: input, shape index: {}]
  %s14 = inlined_call_operand.hbm [shape: f32[2,16,128], index: 14, kind: output, shape index: {0}]
  %s15 = inlined_call_operand.hbm [shape: f32[2,16,128], index: 15, kind: output, shape index: {1}]
  %16 = xla_tuple %s14, %s15
  %s17 = sld [smem:[#allocation0]]
  $region121: #{tpu_custom_call.1} parent=0
    _
  %s19 = ssub.s32 1, %s17
  %s20 = scalar_select 0, %s19, %s17
  $region1: #{tpu_custom_call.1} parent=0
    #allocation2 [shape = 'u8[16384]{0}', space=vmem, size = 0x4000, scoped, tag = 'input window, operand 0']
    #allocation3 [shape = 's32[2]{0}', space=sflag, size = 0x8, scoped, tag = 'scoped memory for tpu_custom_call.1']
    #allocation4 [shape = 's32[2]{0}', space=sflag, size = 0x8, scoped, tag = 'scoped memory for tpu_custom_call.1']
    #allocation5 [shape = 'u8[131072]{0}', space=vmem, size = 0x20000, scoped, tag = 'input window, operand 1']
    #allocation6 [shape = 's32[2]{0}', space=sflag, size = 0x8, scoped, tag = 'scoped memory for tpu_custom_call.1']
    #allocation7 [shape = 'u8[65536]{0}', space=vmem, size = 0x10000, scoped, tag = 'input window, operand 2, single buffered']
    #allocation8 [shape = 'u8[131072]{0}', space=vmem, size = 0x20000, scoped, tag = 'input window, operand 4, single buffered']
    #allocation9 [shape = 's32[1]{0}', space=sflag, size = 0x4, scoped, tag = 'scoped memory for tpu_custom_call.1']
    #allocation10 [shape = 'u8[65536]{0}', space=vmem, size = 0x10000, scoped, tag = 'input window, operand 6, single buffered']
    #allocation11 [shape = 'u8[65536]{0}', space=vmem, size = 0x10000, scoped, tag = 'input window, operand 10, single buffered']
    #allocation12 [shape = 's32[1]{0}', space=sflag, size = 0x4, scoped, tag = 'scoped memory for tpu_custom_call.1']
    #allocation13 [shape = 'u8[16384]{0}', space=vmem, size = 0x4000, scoped, tag = 'output window, operand 0']
    #allocation14 [shape = 'u8[16384]{0}', space=vmem, size = 0x4000, scoped, tag = 'output window, operand 1']
    #allocation15 [shape = 's32[2]{0}', space=sflag, size = 0x8, scoped, tag = 'scoped memory for tpu_custom_call.1']
    %21 = vsyncpa [#allocation3], 0
    %s22 = scalar_lea.sflag [#allocation3], 1
    %23 = vsyncpa %s22, 0
    %24 = vsyncpa [#allocation6], 0
    %s25 = scalar_lea.sflag [#allocation6], 1
    %26 = vsyncpa %s25, 0
    %27 = vsyncpa [#allocation9], 0
    %28 = vsyncpa [#allocation12], 0
    %29 = vsyncpa [#allocation4], 0
    %s30 = scalar_lea.sflag [#allocation4], 1
    %31 = vsyncpa %s30, 0
    %32 = vsyncpa [#allocation15], 0
    %s33 = scalar_lea.sflag [#allocation15], 1
    %34 = vsyncpa %s33, 0
    loop: start=0, step=1, limit=4
    $region2: #{tpu_custom_call.1} parent=1 // loop_pre_header
      _
    $region3: #{tpu_custom_call.1} parent=1 // loop_header
      %s36 = sphi 0, %s40
      %p37 = scmp.ge.s32.totalorder %s36, 4
      %s46 = sphi 0, %s48
      %s49 = sphi 0, %s46
      %s50 = sphi 0, %s49
      %s66 = sphi 0, %s50
      %s72 = sphi 0, %s74
      %s75 = sphi 0, %s72
      %s76 = sphi 0, %s75
      %s92 = sphi 0, %s76
      %s96 = sphi 0, %s96
      %s98 = sphi 0, %s96
      %s99 = sphi 0, %s98
      %s113 = sphi 0, %s99
      %s117 = sphi 0, %s117
      %s119 = sphi 0, %s117
      %s120 = sphi 0, %s119
      %s134 = sphi 0, %s120
      %s138 = sphi 0, %s138
      %s140 = sphi 0, %s138
      %s141 = sphi 0, %s140
      %s155 = sphi 0, %s141
      %s159 = sphi 0, %s159
      %s161 = sphi 0, %s159
      %s162 = sphi 0, %s161
      %s176 = sphi 0, %s162
      %s180 = sphi 0, %s180
      %s182 = sphi 0, %s180
      %s183 = sphi 0, %s182
      %s197 = sphi 0, %s183
      %s201 = sphi 0, %s201
      %s203 = sphi 0, %s201
      %s204 = sphi 0, %s203
      %s218 = sphi 0, %s204
      %s222 = sphi 0, %s222
      %s224 = sphi 0, %s222
      %s225 = sphi 0, %s224
      %s239 = sphi 0, %s225
      %s243 = sphi 0, %s243
      %s245 = sphi 0, %s243
      %s246 = sphi 0, %s245
      %s260 = sphi 0, %s246
      %s264 = sphi 0, %s264
      %s266 = sphi 0, %s264
      %s267 = sphi 0, %s266
      %s281 = sphi 0, %s267
      %s285 = sphi 0, %s285
      %s287 = sphi 0, %s285
      %s288 = sphi 0, %s287
      %s302 = sphi 0, %s288
      %s306 = sphi 0, %s306
      %s308 = sphi 0, %s306
      %s309 = sphi 0, %s308
      %s323 = sphi 0, %s309
      %s327 = sphi 0, %s327
      %s329 = sphi 0, %s327
      %s330 = sphi 0, %s329
      %s344 = sphi 0, %s330
      %s350 = sphi 0, %s352
      %s353 = sphi 0, %s350
      %s354 = sphi 0, %s353
      %s370 = sphi 0, %s354
      %s376 = sphi 0, %s378
      %s379 = sphi 0, %s376
      %s380 = sphi 0, %s379
      %s396 = sphi 0, %s380
    $region4: #{tpu_custom_call.1} parent=1 // loop_header_branch
      %39 = sbr.rel (%p37) target = $region8
    $region5: #{tpu_custom_call.1} parent=1 // loop_body
      %s41 = ssub.s32 %s36, 1
      %s42 = ssub.s32 %s36, 2
      %s43 = sadd.s32 %s36, 1
      %s44 = ssub.s32 %s36, %s43
      %p45 = scmp.eq.s32.totalorder %s44, 0
      %s47 = sadd.s32 %s46, 1
      %s48 = scalar_select %p45, %s46, %s47
      %p51 = pneg %p45
      %p52 = scmp.eq.s32.totalorder %s36, 1
      %p53 = por %p51, %p52
      %p54 = scmp.ne.s32.totalorder %s46, %s49
      %p55 = scmp.eq.s32.totalorder %s36, 0
      %p56 = por %p54, %p55
      %p57 = scmp.ne.s32.totalorder %s46, %s49
      %p58 = scmp.eq.s32.totalorder %s41, 1
      %p59 = por %p57, %p58
      %p60 = scmp.ne.s32.totalorder %s49, %s50
      %p61 = scmp.eq.s32.totalorder %s41, 0
      %p62 = por %p60, %p61
      %p63 = scmp.ne.s32.totalorder %s49, %s50
      %p64 = scmp.eq.s32.totalorder %s42, 1
      %p65 = por %p63, %p64
      %p67 = scmp.ne.s32.totalorder %s50, %s66
      %p68 = scmp.eq.s32.totalorder %s42, 0
      %p69 = por %p67, %p68
      %s70 = ssub.s32 %s36, %s43
      %p71 = scmp.eq.s32.totalorder %s70, 0
      %s73 = sadd.s32 %s72, 1
      %s74 = scalar_select %p71, %s72, %s73
      %p77 = pneg %p71
      %p78 = scmp.eq.s32.totalorder %s36, 1
      %p79 = por %p77, %p78
      %p80 = scmp.ne.s32.totalorder %s72, %s75
      %p81 = scmp.eq.s32.totalorder %s36, 0
      %p82 = por %p80, %p81
      %p83 = scmp.ne.s32.totalorder %s72, %s75
      %p84 = scmp.eq.s32.totalorder %s41, 1
      %p85 = por %p83, %p84
      %p86 = scmp.ne.s32.totalorder %s75, %s76
      %p87 = scmp.eq.s32.totalorder %s41, 0
      %p88 = por %p86, %p87
      %p89 = scmp.ne.s32.totalorder %s75, %s76
      %p90 = scmp.eq.s32.totalorder %s42, 1
      %p91 = por %p89, %p90
      %p93 = scmp.ne.s32.totalorder %s76, %s92
      %p94 = scmp.eq.s32.totalorder %s42, 0
      %p95 = por %p93, %p94
      %s97 = sadd.s32 %s96, 1
      %p100 = scmp.eq.s32.totalorder %s36, 1
      %p101 = scmp.ne.s32.totalorder %s96, %s98
      %p102 = scmp.eq.s32.totalorder %s36, 0
      %p103 = por %p101, %p102
      %p104 = scmp.ne.s32.totalorder %s96, %s98
      %p105 = scmp.eq.s32.totalorder %s41, 1
      %p106 = por %p104, %p105
      %p107 = scmp.ne.s32.totalorder %s98, %s99
      %p108 = scmp.eq.s32.totalorder %s41, 0
      %p109 = por %p107, %p108
      %p110 = scmp.ne.s32.totalorder %s98, %s99
      %p111 = scmp.eq.s32.totalorder %s42, 1
      %p112 = por %p110, %p111
      %p114 = scmp.ne.s32.totalorder %s99, %s113
      %p115 = scmp.eq.s32.totalorder %s42, 0
      %p116 = por %p114, %p115
      %s118 = sadd.s32 %s117, 1
      %p121 = scmp.eq.s32.totalorder %s36, 1
      %p122 = scmp.ne.s32.totalorder %s117, %s119
      %p123 = scmp.eq.s32.totalorder %s36, 0
      %p124 = por %p122, %p123
      %p125 = scmp.ne.s32.totalorder %s117, %s119
      %p126 = scmp.eq.s32.totalorder %s41, 1
      %p127 = por %p125, %p126
      %p128 = scmp.ne.s32.totalorder %s119, %s120
      %p129 = scmp.eq.s32.totalorder %s41, 0
      %p130 = por %p128, %p129
      %p131 = scmp.ne.s32.totalorder %s119, %s120
      %p132 = scmp.eq.s32.totalorder %s42, 1
      %p133 = por %p131, %p132
      %p135 = scmp.ne.s32.totalorder %s120, %s134
      %p136 = scmp.eq.s32.totalorder %s42, 0
      %p137 = por %p135, %p136
      %s139 = sadd.s32 %s138, 1
      %p142 = scmp.eq.s32.totalorder %s36, 1
      %p143 = scmp.ne.s32.totalorder %s138, %s140
      %p144 = scmp.eq.s32.totalorder %s36, 0
      %p145 = por %p143, %p144
      %p146 = scmp.ne.s32.totalorder %s138, %s140
      %p147 = scmp.eq.s32.totalorder %s41, 1
      %p148 = por %p146, %p147
      %p149 = scmp.ne.s32.totalorder %s140, %s141
      %p150 = scmp.eq.s32.totalorder %s41, 0
      %p151 = por %p149, %p150
      %p152 = scmp.ne.s32.totalorder %s140, %s141
      %p153 = scmp.eq.s32.totalorder %s42, 1
      %p154 = por %p152, %p153
      %p156 = scmp.ne.s32.totalorder %s141, %s155
      %p157 = scmp.eq.s32.totalorder %s42, 0
      %p158 = por %p156, %p157
      %s160 = sadd.s32 %s159, 1
      %p163 = scmp.eq.s32.totalorder %s36, 1
      %p164 = scmp.ne.s32.totalorder %s159, %s161
      %p165 = scmp.eq.s32.totalorder %s36, 0
      %p166 = por %p164, %p165
      %p167 = scmp.ne.s32.totalorder %s159, %s161
      %p168 = scmp.eq.s32.totalorder %s41, 1
      %p169 = por %p167, %p168
      %p170 = scmp.ne.s32.totalorder %s161, %s162
      %p171 = scmp.eq.s32.totalorder %s41, 0
      %p172 = por %p170, %p171
      %p173 = scmp.ne.s32.totalorder %s161, %s162
      %p174 = scmp.eq.s32.totalorder %s42, 1
      %p175 = por %p173, %p174
      %p177 = scmp.ne.s32.totalorder %s162, %s176
      %p178 = scmp.eq.s32.totalorder %s42, 0
      %p179 = por %p177, %p178
      %s181 = sadd.s32 %s180, 1
      %p184 = scmp.eq.s32.totalorder %s36, 1
      %p185 = scmp.ne.s32.totalorder %s180, %s182
      %p186 = scmp.eq.s32.totalorder %s36, 0
      %p187 = por %p185, %p186
      %p188 = scmp.ne.s32.totalorder %s180, %s182
      %p189 = scmp.eq.s32.totalorder %s41, 1
      %p190 = por %p188, %p189
      %p191 = scmp.ne.s32.totalorder %s182, %s183
      %p192 = scmp.eq.s32.totalorder %s41, 0
      %p193 = por %p191, %p192
      %p194 = scmp.ne.s32.totalorder %s182, %s183
      %p195 = scmp.eq.s32.totalorder %s42, 1
      %p196 = por %p194, %p195
      %p198 = scmp.ne.s32.totalorder %s183, %s197
      %p199 = scmp.eq.s32.totalorder %s42, 0
      %p200 = por %p198, %p199
      %s202 = sadd.s32 %s201, 1
      %p205 = scmp.eq.s32.totalorder %s36, 1
      %p206 = scmp.ne.s32.totalorder %s201, %s203
      %p207 = scmp.eq.s32.totalorder %s36, 0
      %p208 = por %p206, %p207
      %p209 = scmp.ne.s32.totalorder %s201, %s203
      %p210 = scmp.eq.s32.totalorder %s41, 1
      %p211 = por %p209, %p210
      %p212 = scmp.ne.s32.totalorder %s203, %s204
      %p213 = scmp.eq.s32.totalorder %s41, 0
      %p214 = por %p212, %p213
      %p215 = scmp.ne.s32.totalorder %s203, %s204
      %p216 = scmp.eq.s32.totalorder %s42, 1
      %p217 = por %p215, %p216
      %p219 = scmp.ne.s32.totalorder %s204, %s218
      %p220 = scmp.eq.s32.totalorder %s42, 0
      %p221 = por %p219, %p220
      %s223 = sadd.s32 %s222, 1
      %p226 = scmp.eq.s32.totalorder %s36, 1
      %p227 = scmp.ne.s32.totalorder %s222, %s224
      %p228 = scmp.eq.s32.totalorder %s36, 0
      %p229 = por %p227, %p228
      %p230 = scmp.ne.s32.totalorder %s222, %s224
      %p231 = scmp.eq.s32.totalorder %s41, 1
      %p232 = por %p230, %p231
      %p233 = scmp.ne.s32.totalorder %s224, %s225
      %p234 = scmp.eq.s32.totalorder %s41, 0
      %p235 = por %p233, %p234
      %p236 = scmp.ne.s32.totalorder %s224, %s225
      %p237 = scmp.eq.s32.totalorder %s42, 1
      %p238 = por %p236, %p237
      %p240 = scmp.ne.s32.totalorder %s225, %s239
      %p241 = scmp.eq.s32.totalorder %s42, 0
      %p242 = por %p240, %p241
      %s244 = sadd.s32 %s243, 1
      %p247 = scmp.eq.s32.totalorder %s36, 1
      %p248 = scmp.ne.s32.totalorder %s243, %s245
      %p249 = scmp.eq.s32.totalorder %s36, 0
      %p250 = por %p248, %p249
      %p251 = scmp.ne.s32.totalorder %s243, %s245
      %p252 = scmp.eq.s32.totalorder %s41, 1
      %p253 = por %p251, %p252
      %p254 = scmp.ne.s32.totalorder %s245, %s246
      %p255 = scmp.eq.s32.totalorder %s41, 0
      %p256 = por %p254, %p255
      %p257 = scmp.ne.s32.totalorder %s245, %s246
      %p258 = scmp.eq.s32.totalorder %s42, 1
      %p259 = por %p257, %p258
      %p261 = scmp.ne.s32.totalorder %s246, %s260
      %p262 = scmp.eq.s32.totalorder %s42, 0
      %p263 = por %p261, %p262
      %s265 = sadd.s32 %s264, 1
      %p268 = scmp.eq.s32.totalorder %s36, 1
      %p269 = scmp.ne.s32.totalorder %s264, %s266
      %p270 = scmp.eq.s32.totalorder %s36, 0
      %p271 = por %p269, %p270
      %p272 = scmp.ne.s32.totalorder %s264, %s266
      %p273 = scmp.eq.s32.totalorder %s41, 1
      %p274 = por %p272, %p273
      %p275 = scmp.ne.s32.totalorder %s266, %s267
      %p276 = scmp.eq.s32.totalorder %s41, 0
      %p277 = por %p275, %p276
      %p278 = scmp.ne.s32.totalorder %s266, %s267
      %p279 = scmp.eq.s32.totalorder %s42, 1
      %p280 = por %p278, %p279
      %p282 = scmp.ne.s32.totalorder %s267, %s281
      %p283 = scmp.eq.s32.totalorder %s42, 0
      %p284 = por %p282, %p283
      %s286 = sadd.s32 %s285, 1
      %p289 = scmp.eq.s32.totalorder %s36, 1
      %p290 = scmp.ne.s32.totalorder %s285, %s287
      %p291 = scmp.eq.s32.totalorder %s36, 0
      %p292 = por %p290, %p291
      %p293 = scmp.ne.s32.totalorder %s285, %s287
      %p294 = scmp.eq.s32.totalorder %s41, 1
      %p295 = por %p293, %p294
      %p296 = scmp.ne.s32.totalorder %s287, %s288
      %p297 = scmp.eq.s32.totalorder %s41, 0
      %p298 = por %p296, %p297
      %p299 = scmp.ne.s32.totalorder %s287, %s288
      %p300 = scmp.eq.s32.totalorder %s42, 1
      %p301 = por %p299, %p300
      %p303 = scmp.ne.s32.totalorder %s288, %s302
      %p304 = scmp.eq.s32.totalorder %s42, 0
      %p305 = por %p303, %p304
      %s307 = sadd.s32 %s306, 1
      %p310 = scmp.eq.s32.totalorder %s36, 1
      %p311 = scmp.ne.s32.totalorder %s306, %s308
      %p312 = scmp.eq.s32.totalorder %s36, 0
      %p313 = por %p311, %p312
      %p314 = scmp.ne.s32.totalorder %s306, %s308
      %p315 = scmp.eq.s32.totalorder %s41, 1
      %p316 = por %p314, %p315
      %p317 = scmp.ne.s32.totalorder %s308, %s309
      %p318 = scmp.eq.s32.totalorder %s41, 0
      %p319 = por %p317, %p318
      %p320 = scmp.ne.s32.totalorder %s308, %s309
      %p321 = scmp.eq.s32.totalorder %s42, 1
      %p322 = por %p320, %p321
      %p324 = scmp.ne.s32.totalorder %s309, %s323
      %p325 = scmp.eq.s32.totalorder %s42, 0
      %p326 = por %p324, %p325
      %s328 = sadd.s32 %s327, 1
      %p331 = scmp.eq.s32.totalorder %s36, 1
      %p332 = scmp.ne.s32.totalorder %s327, %s329
      %p333 = scmp.eq.s32.totalorder %s36, 0
      %p334 = por %p332, %p333
      %p335 = scmp.ne.s32.totalorder %s327, %s329
      %p336 = scmp.eq.s32.totalorder %s41, 1
      %p337 = por %p335, %p336
      %p338 = scmp.ne.s32.totalorder %s329, %s330
      %p339 = scmp.eq.s32.totalorder %s41, 0
      %p340 = por %p338, %p339
      %p341 = scmp.ne.s32.totalorder %s329, %s330
      %p342 = scmp.eq.s32.totalorder %s42, 1
      %p343 = por %p341, %p342
      %p345 = scmp.ne.s32.totalorder %s330, %s344
      %p346 = scmp.eq.s32.totalorder %s42, 0
      %p347 = por %p345, %p346
      %s348 = ssub.s32 %s36, %s43
      %p349 = scmp.eq.s32.totalorder %s348, 0
      %s351 = sadd.s32 %s350, 1
      %s352 = scalar_select %p349, %s350, %s351
      %p355 = pneg %p349
      %p356 = scmp.eq.s32.totalorder %s36, 1
      %p357 = por %p355, %p356
      %p358 = scmp.ne.s32.totalorder %s350, %s353
      %p359 = scmp.eq.s32.totalorder %s36, 0
      %p360 = por %p358, %p359
      %p361 = scmp.ne.s32.totalorder %s350, %s353
      %p362 = scmp.eq.s32.totalorder %s41, 1
      %p363 = por %p361, %p362
      %p364 = scmp.ne.s32.totalorder %s353, %s354
      %p365 = scmp.eq.s32.totalorder %s41, 0
      %p366 = por %p364, %p365
      %p367 = scmp.ne.s32.totalorder %s353, %s354
      %p368 = scmp.eq.s32.totalorder %s42, 1
      %p369 = por %p367, %p368
      %p371 = scmp.ne.s32.totalorder %s354, %s370
      %p372 = scmp.eq.s32.totalorder %s42, 0
      %p373 = por %p371, %p372
      %s374 = ssub.s32 %s36, %s43
      %p375 = scmp.eq.s32.totalorder %s374, 0
      %s377 = sadd.s32 %s376, 1
      %s378 = scalar_select %p375, %s376, %s377
      %p381 = pneg %p375
      %p382 = scmp.eq.s32.totalorder %s36, 1
      %p383 = por %p381, %p382
      %p384 = scmp.ne.s32.totalorder %s376, %s379
      %p385 = scmp.eq.s32.totalorder %s36, 0
      %p386 = por %p384, %p385
      %p387 = scmp.ne.s32.totalorder %s376, %s379
      %p388 = scmp.eq.s32.totalorder %s41, 1
      %p389 = por %p387, %p388
      %p390 = scmp.ne.s32.totalorder %s379, %s380
      %p391 = scmp.eq.s32.totalorder %s41, 0
      %p392 = por %p390, %p391
      %p393 = scmp.ne.s32.totalorder %s379, %s380
      %p394 = scmp.eq.s32.totalorder %s42, 1
      %p395 = por %p393, %p394
      %p397 = scmp.ne.s32.totalorder %s380, %s396
      %p398 = scmp.eq.s32.totalorder %s42, 0
      %p399 = por %p397, %p398
      %p400 = scmp.le.s32.totalorder 1, %s36
      %p401 = scmp.lt.s32.totalorder %s36, 3
      %p402 = pnand %p400, %p401
      %p403 = pneg %p402
      // Predicated region
      $region9: #{tpu_custom_call.1} parent=5 // pred_check
        _
      $region10: #{tpu_custom_call.1} parent=5 // pred_check_branch
        %405 = sbr.rel (%p402) target = $region12
      $region11: #{tpu_custom_call.1} parent=5 // pred_region
        %s406 = ssub.s32 %s36, 1
        // Predicated region
        $region13: #{tpu_custom_call.1} parent=11 // pred_check
          %p407 = pneg %p109
        $region14: #{tpu_custom_call.1} parent=11 // pred_check_branch
          %409 = sbr.rel (%p407) target = $region16
        $region15: #{tpu_custom_call.1} parent=11 // pred_region
          %s411 = ssub.s32 2048, 2048
          %412 = vsyncadd [#allocation6], %s411
          %s413 = sshll.u32 [#allocation7], 4
          %s414 = int_to_ptr.vmem [resolvable:$true] %s413
          %419 = dma.hbm_to_vmem [thread:$0]  %s2, 2048, %s414, [#allocation6], 128, 128, 8
        $region16: #{tpu_custom_call.1} parent=11 // pred_fallthru
          _
        // Predicated region
        $region17: #{tpu_custom_call.1} parent=11 // pred_check
          %p420 = pneg %p130
        $region18: #{tpu_custom_call.1} parent=11 // pred_check_branch
          %422 = sbr.rel (%p420) target = $region20
        $region19: #{tpu_custom_call.1} parent=11 // pred_region
          _
        $region20: #{tpu_custom_call.1} parent=11 // pred_fallthru
          _
        // Predicated region
        $region21: #{tpu_custom_call.1} parent=11 // pred_check
          %p423 = pneg %p151
        $region22: #{tpu_custom_call.1} parent=11 // pred_check_branch
          %425 = sbr.rel (%p423) target = $region24
        $region23: #{tpu_custom_call.1} parent=11 // pred_region
          %s427 = ssub.s32 4096, 4096
          %428 = vsyncadd [#allocation9], %s427
          %s429 = sshll.u32 [#allocation8], 4
          %s430 = int_to_ptr.vmem [resolvable:$true] %s429
          %435 = dma.hbm_to_vmem [thread:$0]  %s4, 4096, %s430, [#allocation9], 256, 256, 16
        $region24: #{tpu_custom_call.1} parent=11 // pred_fallthru
          _
        // Predicated region
        $region25: #{tpu_custom_call.1} parent=11 // pred_check
          %p436 = pneg %p172
        $region26: #{tpu_custom_call.1} parent=11 // pred_check_branch
          %438 = sbr.rel (%p436) target = $region28
        $region27: #{tpu_custom_call.1} parent=11 // pred_region
          _
        $region28: #{tpu_custom_call.1} parent=11 // pred_fallthru
          _
        // Predicated region
        $region29: #{tpu_custom_call.1} parent=11 // pred_check
          %p439 = pneg %p193
        $region30: #{tpu_custom_call.1} parent=11 // pred_check_branch
          %441 = sbr.rel (%p439) target = $region32
        $region31: #{tpu_custom_call.1} parent=11 // pred_region
          %s443 = ssub.s32 2048, 2048
          %444 = vsyncadd [#allocation9], %s443
          %s445 = sshll.u32 [#allocation10], 4
          %s446 = int_to_ptr.vmem [resolvable:$true] %s445
          %451 = dma.hbm_to_vmem [thread:$0]  %s6, 2048, %s446, [#allocation9], 128, 128, 8
        $region32: #{tpu_custom_call.1} parent=11 // pred_fallthru
          _
        // Predicated region
        $region33: #{tpu_custom_call.1} parent=11 // pred_check
          %p452 = pneg %p214
        $region34: #{tpu_custom_call.1} parent=11 // pred_check_branch
          %454 = sbr.rel (%p452) target = $region36
        $region35: #{tpu_custom_call.1} parent=11 // pred_region
          _
        $region36: #{tpu_custom_call.1} parent=11 // pred_fallthru
          _
        // Predicated region
        $region37: #{tpu_custom_call.1} parent=11 // pred_check
          %p455 = pneg %p235
        $region38: #{tpu_custom_call.1} parent=11 // pred_check_branch
          %457 = sbr.rel (%p455) target = $region40
        $region39: #{tpu_custom_call.1} parent=11 // pred_region
          _
        $region40: #{tpu_custom_call.1} parent=11 // pred_fallthru
          _
        // Predicated region
        $region41: #{tpu_custom_call.1} parent=11 // pred_check
          %p458 = pneg %p256
        $region42: #{tpu_custom_call.1} parent=11 // pred_check_branch
          %460 = sbr.rel (%p458) target = $region44
        $region43: #{tpu_custom_call.1} parent=11 // pred_region
          _
        $region44: #{tpu_custom_call.1} parent=11 // pred_fallthru
          _
        // Predicated region
        $region45: #{tpu_custom_call.1} parent=11 // pred_check
          %p461 = pneg %p277
        $region46: #{tpu_custom_call.1} parent=11 // pred_check_branch
          %463 = sbr.rel (%p461) target = $region48
        $region47: #{tpu_custom_call.1} parent=11 // pred_region
          %s465 = ssub.s32 2048, 2048
          %466 = vsyncadd [#allocation12], %s465
          %s467 = sshll.u32 [#allocation11], 4
          %s468 = int_to_ptr.vmem [resolvable:$true] %s467
          %473 = dma.hbm_to_vmem [thread:$0]  %s10, 2048, %s468, [#allocation12], 128, 128, 8
        $region48: #{tpu_custom_call.1} parent=11 // pred_fallthru
          _
        // Predicated region
        $region49: #{tpu_custom_call.1} parent=11 // pred_check
          %p474 = pneg %p298
        $region50: #{tpu_custom_call.1} parent=11 // pred_check_branch
          %476 = sbr.rel (%p474) target = $region52
        $region51: #{tpu_custom_call.1} parent=11 // pred_region
          _
        $region52: #{tpu_custom_call.1} parent=11 // pred_fallthru
          _
        // Predicated region
        $region53: #{tpu_custom_call.1} parent=11 // pred_check
          %p477 = pneg %p319
        $region54: #{tpu_custom_call.1} parent=11 // pred_check_branch
          %479 = sbr.rel (%p477) target = $region56
        $region55: #{tpu_custom_call.1} parent=11 // pred_region
          _
        $region56: #{tpu_custom_call.1} parent=11 // pred_fallthru
          _
        // Predicated region
        $region57: #{tpu_custom_call.1} parent=11 // pred_check
          %p480 = pneg %p340
        $region58: #{tpu_custom_call.1} parent=11 // pred_check_branch
          %482 = sbr.rel (%p480) target = $region60
        $region59: #{tpu_custom_call.1} parent=11 // pred_region
          _
        $region60: #{tpu_custom_call.1} parent=11 // pred_fallthru
          _
      $region12: #{tpu_custom_call.1} parent=5 // pred_fallthru
        _
      %p483 = scmp.lt.s32.totalorder %s36, 2
      // Predicated region
      $region61: #{tpu_custom_call.1} parent=5 // pred_check
        %p484 = pneg %p483
      $region62: #{tpu_custom_call.1} parent=5 // pred_check_branch
        %486 = sbr.rel (%p484) target = $region64
      $region63: #{tpu_custom_call.1} parent=5 // pred_region
        // Predicated region
        $region65: #{tpu_custom_call.1} parent=63 // pred_check
          %p487 = pneg %p56
        $region66: #{tpu_custom_call.1} parent=63 // pred_check_branch
          %489 = sbr.rel (%p487) target = $region68
        $region67: #{tpu_custom_call.1} parent=63 // pred_region
          %s490 = sand.u32 %s46, 1
          %s491 = scalar_lea.sflag [#allocation3], %s490
          %s492 = sand.u32 %s46, 1
          %s493 = smul.addr %s492, 16
          %s494 = scalar_lea.vmem [#allocation2], %s493
          %s496 = ssub.s32 256, 256
          %497 = vsyncadd %s491, %s496
          %s498 = smul.addr %s36, 2
          %s499 = smul.addr %s498, 128
          %s500 = scalar_lea.hbm %s0, %s499
          %s501 = sshll.u32 %s494, 4
          %s502 = int_to_ptr.vmem [resolvable:$true] %s501
          %507 = dma.hbm_to_vmem [thread:$0]  %s500, 256, %s502, %s491, 128, 128, 8
        $region68: #{tpu_custom_call.1} parent=63 // pred_fallthru
          _
        // Predicated region
        $region69: #{tpu_custom_call.1} parent=63 // pred_check
          %p508 = pneg %p82
        $region70: #{tpu_custom_call.1} parent=63 // pred_check_branch
          %510 = sbr.rel (%p508) target = $region72
        $region71: #{tpu_custom_call.1} parent=63 // pred_region
          %s511 = sand.u32 %s36, 1
          %s512 = scalar_lea.sflag [#allocation6], %s511
          %s513 = sand.u32 %s72, 1
          %s514 = smul.addr %s513, 128
          %s515 = scalar_lea.vmem [#allocation5], %s514
          %s517 = ssub.s32 2048, 2048
          %518 = vsyncadd %s512, %s517
          %s519 = smul.addr %s36, 16
          %s520 = smul.addr %s519, 128
          %s521 = scalar_lea.hbm %s1, %s520
          %s522 = sshll.u32 %s515, 4
          %s523 = int_to_ptr.vmem [resolvable:$true] %s522
          %528 = dma.hbm_to_vmem [thread:$0]  %s521, 2048, %s523, %s512, 128, 128, 8
        $region72: #{tpu_custom_call.1} parent=63 // pred_fallthru
          _
      $region64: #{tpu_custom_call.1} parent=5 // pred_fallthru
        _
      %p529 = scmp.le.s32.totalorder 1, %s36
      %p530 = scmp.lt.s32.totalorder %s36, 3
      %p531 = pnand %p529, %p530
      %p532 = pneg %p531
      // Predicated region
      $region73: #{tpu_custom_call.1} parent=5 // pred_check
        _
      $region74: #{tpu_custom_call.1} parent=5 // pred_check_branch
        %534 = sbr.rel (%p531) target = $region76
      $region75: #{tpu_custom_call.1} parent=5 // pred_region
        %s535 = ssub.s32 %s36, 1
        %s536 = sand.u32 %s49, 1
        %s537 = scalar_lea.sflag [#allocation3], %s536
        %s538 = sand.u32 %s49, 1
        %s539 = smul.addr %s538, 16
        %s540 = scalar_lea.vmem [#allocation2], %s539
        // Predicated region
        $region77: #{tpu_custom_call.1} parent=75 // pred_check
          %p541 = pneg %p62
        $region78: #{tpu_custom_call.1} parent=75 // pred_check_branch
          %543 = sbr.rel (%p541) target = $region80
        $region79: #{tpu_custom_call.1} parent=75 // pred_region
          %544 = dma.done %s537, 256
        $region80: #{tpu_custom_call.1} parent=75 // pred_fallthru
          _
        %s545 = sand.u32 %s41, 1
        %s546 = scalar_lea.sflag [#allocation6], %s545
        %s547 = sand.u32 %s75, 1
        %s548 = smul.addr %s547, 128
        %s549 = scalar_lea.vmem [#allocation5], %s548
        // Predicated region
        $region81: #{tpu_custom_call.1} parent=75 // pred_check
          %p550 = pneg %p88
        $region82: #{tpu_custom_call.1} parent=75 // pred_check_branch
          %552 = sbr.rel (%p550) target = $region84
        $region83: #{tpu_custom_call.1} parent=75 // pred_region
          %553 = dma.done %s546, 2048
        $region84: #{tpu_custom_call.1} parent=75 // pred_fallthru
          _
        // Predicated region
        $region85: #{tpu_custom_call.1} parent=75 // pred_check
          %p554 = pneg %p109
        $region86: #{tpu_custom_call.1} parent=75 // pred_check_branch
          %556 = sbr.rel (%p554) target = $region88
        $region87: #{tpu_custom_call.1} parent=75 // pred_region
          %557 = dma.done [#allocation6], 2048
        $region88: #{tpu_custom_call.1} parent=75 // pred_fallthru
          _
        // Predicated region
        $region89: #{tpu_custom_call.1} parent=75 // pred_check
          %p558 = pneg %p151
        $region90: #{tpu_custom_call.1} parent=75 // pred_check_branch
          %560 = sbr.rel (%p558) target = $region92
        $region91: #{tpu_custom_call.1} parent=75 // pred_region
          %561 = dma.done [#allocation9], 4096
        $region92: #{tpu_custom_call.1} parent=75 // pred_fallthru
          _
        // Predicated region
        $region93: #{tpu_custom_call.1} parent=75 // pred_check
          %p562 = pneg %p193
        $region94: #{tpu_custom_call.1} parent=75 // pred_check_branch
          %564 = sbr.rel (%p562) target = $region96
        $region95: #{tpu_custom_call.1} parent=75 // pred_region
          %565 = dma.done [#allocation9], 2048
        $region96: #{tpu_custom_call.1} parent=75 // pred_fallthru
          _
        // Predicated region
        $region97: #{tpu_custom_call.1} parent=75 // pred_check
          %p566 = pneg %p277
        $region98: #{tpu_custom_call.1} parent=75 // pred_check_branch
          %568 = sbr.rel (%p566) target = $region100
        $region99: #{tpu_custom_call.1} parent=75 // pred_region
          %569 = dma.done [#allocation12], 2048
        $region100: #{tpu_custom_call.1} parent=75 // pred_fallthru
          _
        %s570 = sand.u32 %s49, 1
        %s571 = scalar_lea.sflag [#allocation3], %s570
        %s572 = sand.u32 %s49, 1
        %s573 = smul.addr %s572, 16
        %s574 = scalar_lea.vmem [#allocation2], %s573
        %p575 = pneg %p62
        %p576 = pneg %p59
        %s577 = sand.u32 %s41, 1
        %s578 = scalar_lea.sflag [#allocation6], %s577
        %s579 = sand.u32 %s75, 1
        %s580 = smul.addr %s579, 128
        %s581 = scalar_lea.vmem [#allocation5], %s580
        %p582 = pneg %p88
        %p583 = pneg %p85
        %p584 = pneg %p109
        %p585 = pneg %p106
        %p586 = pneg %p130
        %p587 = pneg %p127
        %p588 = pneg %p151
        %p589 = pneg %p148
        %p590 = pneg %p172
        %p591 = pneg %p169
        %p592 = pneg %p193
        %p593 = pneg %p190
        %p594 = pneg %p214
        %p595 = pneg %p211
        %p596 = pneg %p235
        %p597 = pneg %p232
        %p598 = pneg %p256
        %p599 = pneg %p253
        %p600 = pneg %p277
        %p601 = pneg %p274
        %p602 = pneg %p298
        %p603 = pneg %p295
        %p604 = pneg %p319
        %p605 = pneg %p316
        %p606 = pneg %p340
        %p607 = pneg %p337
        %p608 = pneg %p366
        %p609 = pneg %p363
        %s610 = sand.u32 %s353, 1
        %s611 = scalar_lea.sflag [#allocation4], %s610
        %s612 = sand.u32 %s353, 1
        %s613 = smul.addr %s612, 16
        %s614 = scalar_lea.vmem [#allocation13], %s613
        %p615 = pneg %p392
        %p616 = pneg %p389
        %s617 = sand.u32 %s379, 1
        %s618 = scalar_lea.sflag [#allocation15], %s617
        %s619 = sand.u32 %s379, 1
        %s620 = smul.addr %s619, 16
        %s621 = scalar_lea.vmem [#allocation14], %s620
        %v622 = vld [vmem:[%s540] sm:$0xff]
        %v623 = vld [vmem:[%s540 + $0x8] sm:$0xff]
        %v624 = vld [vmem:[%s549] sm:$0xff]
        %v625 = vld [vmem:[%s549 + $0x8] sm:$0xff]
        %v626 = vld [vmem:[%s549 + $0x10] sm:$0xff]
        %v627 = vld [vmem:[%s549 + $0x18] sm:$0xff]
        %v628 = vld [vmem:[%s549 + $0x20] sm:$0xff]
        %v629 = vld [vmem:[%s549 + $0x28] sm:$0xff]
        %v630 = vld [vmem:[%s549 + $0x30] sm:$0xff]
        %v631 = vld [vmem:[%s549 + $0x38] sm:$0xff]
        %v632 = vld [vmem:[%s549 + $0x40] sm:$0xff]
        %v633 = vld [vmem:[%s549 + $0x48] sm:$0xff]
        %v634 = vld [vmem:[%s549 + $0x50] sm:$0xff]
        %v635 = vld [vmem:[%s549 + $0x58] sm:$0xff]
        %v636 = vld [vmem:[%s549 + $0x60] sm:$0xff]
        %v637 = vld [vmem:[%s549 + $0x68] sm:$0xff]
        %v638 = vld [vmem:[%s549 + $0x70] sm:$0xff]
        %v639 = vld [vmem:[%s549 + $0x78] sm:$0xff]
        %v640 = vld [vmem:[#allocation7] sm:$0xff]
        %v641 = vld [vmem:[#allocation7 + $0x8] sm:$0xff]
        %v642 = vld [vmem:[#allocation7 + $0x10] sm:$0xff]
        %v643 = vld [vmem:[#allocation7 + $0x18] sm:$0xff]
        %v644 = vld [vmem:[#allocation7 + $0x20] sm:$0xff]
        %v645 = vld [vmem:[#allocation7 + $0x28] sm:$0xff]
        %v646 = vld [vmem:[#allocation7 + $0x30] sm:$0xff]
        %v647 = vld [vmem:[#allocation7 + $0x38] sm:$0xff]
        %v648 = vld [vmem:[#allocation7 + $0x40] sm:$0xff]
        %v649 = vld [vmem:[#allocation7 + $0x48] sm:$0xff]
        %v650 = vld [vmem:[#allocation7 + $0x50] sm:$0xff]
        %v651 = vld [vmem:[#allocation7 + $0x58] sm:$0xff]
        %v652 = vld [vmem:[#allocation7 + $0x60] sm:$0xff]
        %v653 = vld [vmem:[#allocation7 + $0x68] sm:$0xff]
        %v654 = vld [vmem:[#allocation7 + $0x70] sm:$0xff]
        %v655 = vld [vmem:[#allocation7 + $0x78] sm:$0xff]
        %v656 = vld [vmem:[%s3] sm:$0x1]
        %v658 = vlaneseq
        %v659 = vshrl.u32 %v658, 7
        %v660 = vsub.s32 0, %v659
        %v661 = vrot.slane %v656, %v660
        %663 = vmatprep.subr.mxu0 0.0
        %664 = vmatpush1.msra.mxu0 %v655
        %665 = vmatprep.subr.mxu0 0.0
        %666 = vmatpush1.msra.mxu0 %v654
        %667 = vmatprep.subr.mxu0 0.0
        %668 = vmatpush1.msra.mxu0 %v653
        %669 = vmatprep.subr.mxu0 0.0
        %670 = vmatpush1.msra.mxu0 %v652
        %671 = vmatprep.subr.mxu0 0.0
        %672 = vmatpush1.msra.mxu0 %v651
        %673 = vmatprep.subr.mxu0 0.0
        %674 = vmatpush1.msra.mxu0 %v650
        %675 = vmatprep.subr.mxu0 0.0
        %676 = vmatpush1.msra.mxu0 %v649
        %677 = vmatprep.subr.mxu0 0.0
        %678 = vmatpush1.msra.mxu0 %v648
        %679 = vmatprep.subr.mxu0 0.0
        %680 = vmatpush1.msra.mxu0 %v647
        %681 = vmatprep.subr.mxu0 0.0
        %682 = vmatpush1.msra.mxu0 %v646
        %683 = vmatprep.subr.mxu0 0.0
        %684 = vmatpush1.msra.mxu0 %v645
        %685 = vmatprep.subr.mxu0 0.0
        %686 = vmatpush1.msra.mxu0 %v644
        %687 = vmatprep.subr.mxu0 0.0
        %688 = vmatpush1.msra.mxu0 %v643
        %689 = vmatprep.subr.mxu0 0.0
        %690 = vmatpush1.msra.mxu0 %v642
        %691 = vmatprep.subr.mxu0 0.0
        %692 = vmatpush1.msra.mxu0 %v641
        %693 = vmatprep.subr.mxu0 0.0
        %694 = vmatpush1.msra.mxu0 %v640
        %695 = vmatprep.subr.mxu0 0.0
        %696 = vmatpush2.msra.mxu0 0.0
        %697 = vmatprep.subr.mxu0 0.0
        %698 = vmatpush2.msra.mxu0 0.0
        %699 = vmatprep.subr.mxu0 0.0
        %700 = vmatpush2.msra.mxu0 0.0
        %701 = vmatprep.subr.mxu0 0.0
        %702 = vmatpush2.msra.mxu0 0.0
        %703 = vmatprep.subr.mxu0 0.0
        %704 = vmatpush2.msra.mxu0 0.0
        %705 = vmatprep.subr.mxu0 0.0
        %706 = vmatpush2.msra.mxu0 0.0
        %707 = vmatprep.subr.mxu0 0.0
        %708 = vmatpush2.msra.mxu0 0.0
        %709 = vmatprep.subr.mxu0 0.0
        %710 = vmatpush2.msra.mxu0 0.0
        %711 = vmatprep.subr.mxu0 0.0
        %712 = vmatpush2.msra.mxu0 0.0
        %713 = vmatprep.subr.mxu0 0.0
        %714 = vmatpush2.msra.mxu0 0.0
        %715 = vmatprep.subr.mxu0 0.0
        %716 = vmatpush2.msra.mxu0 0.0
        %717 = vmatprep.subr.mxu0 0.0
        %718 = vmatpush2.msra.mxu0 0.0
        %719 = vmatprep.subr.mxu0 0.0
        %720 = vmatpush2.msra.mxu0 0.0
        %721 = vmatprep.subr.mxu0 0.0
        %722 = vmatpush2.msra.mxu0 0.0
        %723 = vmatprep.subr.mxu0 0.0
        %724 = vmatpush2.msra.mxu0 0.0
        %725 = vmatprep.subr.mxu0 0.0
        %726 = vmatpush2.msra.mxu0 0.0
        %727 = vmatprep.mubr.f32.mxu0 0.0
        %728 = vmatmul.mubr.f32.gmra.mxu0 %v622
        %v729 = vpop.f32.mrf.mxu0
        %v730 = vadd.f32 %v661, %v729
        %v731 = vpop.f32.mrf.mxu0
        %732 = vmatprep.mubr.f32.mxu0 0.0
        %733 = vmatmul.mubr.f32.gmra.mxu0 %v623
        %v734 = vpop.f32.mrf.mxu0
        %v735 = vadd.f32 %v661, %v734
        %v736 = vpop.f32.mrf.mxu0
        %737 = vdwg.mxu0
        %v738 = vld [vmem:[#allocation8] sm:$0xff]
        %v739 = vld [vmem:[#allocation8 + $0x8] sm:$0xff]
        %v740 = vld [vmem:[#allocation8 + $0x10] sm:$0xff]
        %v741 = vld [vmem:[#allocation8 + $0x18] sm:$0xff]
        %v742 = vld [vmem:[#allocation8 + $0x20] sm:$0xff]
        %v743 = vld [vmem:[#allocation8 + $0x28] sm:$0xff]
        %v744 = vld [vmem:[#allocation8 + $0x30] sm:$0xff]
        %v745 = vld [vmem:[#allocation8 + $0x38] sm:$0xff]
        %v746 = vld [vmem:[#allocation8 + $0x40] sm:$0xff]
        %v747 = vld [vmem:[#allocation8 + $0x48] sm:$0xff]
        %v748 = vld [vmem:[#allocation8 + $0x50] sm:$0xff]
        %v749 = vld [vmem:[#allocation8 + $0x58] sm:$0xff]
        %v750 = vld [vmem:[#allocation8 + $0x60] sm:$0xff]
        %v751 = vld [vmem:[#allocation8 + $0x68] sm:$0xff]
        %v752 = vld [vmem:[#allocation8 + $0x70] sm:$0xff]
        %v753 = vld [vmem:[#allocation8 + $0x78] sm:$0xff]
        %v754 = vld [vmem:[#allocation8 + $0x80] sm:$0xff]
        %v755 = vld [vmem:[#allocation8 + $0x88] sm:$0xff]
        %v756 = vld [vmem:[#allocation8 + $0x90] sm:$0xff]
        %v757 = vld [vmem:[#allocation8 + $0x98] sm:$0xff]
        %v758 = vld [vmem:[#allocation8 + $0xa0] sm:$0xff]
        %v759 = vld [vmem:[#allocation8 + $0xa8] sm:$0xff]
        %v760 = vld [vmem:[#allocation8 + $0xb0] sm:$0xff]
        %v761 = vld [vmem:[#allocation8 + $0xb8] sm:$0xff]
        %v762 = vld [vmem:[#allocation8 + $0xc0] sm:$0xff]
        %v763 = vld [vmem:[#allocation8 + $0xc8] sm:$0xff]
        %v764 = vld [vmem:[#allocation8 + $0xd0] sm:$0xff]
        %v765 = vld [vmem:[#allocation8 + $0xd8] sm:$0xff]
        %v766 = vld [vmem:[#allocation8 + $0xe0] sm:$0xff]
        %v767 = vld [vmem:[#allocation8 + $0xe8] sm:$0xff]
        %v768 = vld [vmem:[#allocation8 + $0xf0] sm:$0xff]
        %v769 = vld [vmem:[#allocation8 + $0xf8] sm:$0xff]
        %v770 = vld [vmem:[%s5] sm:$0x3]
        %v772 = vlaneseq
        %v773 = vshrl.u32 %v772, 7
        %v774 = vsub.s32 0, %v773
        %v775 = vrot.slane %v770, %v774
        %v776 = vlaneseq
        %v777 = vshrl.u32 %v776, 7
        %v778 = vsub.s32 1, %v777
        %v779 = vrot.slane %v770, %v778
        %782 = vmatprep.subr.mxu0 %v769
        %783 = vmatpush1.msra.mxu0 %v768
        %784 = vmatprep.subr.mxu0 %v767
        %785 = vmatpush1.msra.mxu0 %v766
        %786 = vmatprep.subr.mxu0 %v765
        %787 = vmatpush1.msra.mxu0 %v764
        %788 = vmatprep.subr.mxu0 %v763
        %789 = vmatpush1.msra.mxu0 %v762
        %790 = vmatprep.subr.mxu0 %v761
        %791 = vmatpush1.msra.mxu0 %v760
        %792 = vmatprep.subr.mxu0 %v759
        %793 = vmatpush1.msra.mxu0 %v758
        %794 = vmatprep.subr.mxu0 %v757
        %795 = vmatpush1.msra.mxu0 %v756
        %796 = vmatprep.subr.mxu0 %v755
        %797 = vmatpush1.msra.mxu0 %v754
        %798 = vmatprep.subr.mxu0 %v753
        %799 = vmatpush1.msra.mxu0 %v752
        %800 = vmatprep.subr.mxu0 %v751
        %801 = vmatpush1.msra.mxu0 %v750
        %802 = vmatprep.subr.mxu0 %v749
        %803 = vmatpush1.msra.mxu0 %v748
        %804 = vmatprep.subr.mxu0 %v747
        %805 = vmatpush1.msra.mxu0 %v746
        %806 = vmatprep.subr.mxu0 %v745
        %807 = vmatpush1.msra.mxu0 %v744
        %808 = vmatprep.subr.mxu0 %v743
        %809 = vmatpush1.msra.mxu0 %v742
        %810 = vmatprep.subr.mxu0 %v741
        %811 = vmatpush1.msra.mxu0 %v740
        %812 = vmatprep.subr.mxu0 %v739
        %813 = vmatpush1.msra.mxu0 %v738
        %814 = vmatprep.subr.mxu0 0.0
        %815 = vmatpush2.msra.mxu0 0.0
        %816 = vmatprep.subr.mxu0 0.0
        %817 = vmatpush2.msra.mxu0 0.0
        %818 = vmatprep.subr.mxu0 0.0
        %819 = vmatpush2.msra.mxu0 0.0
        %820 = vmatprep.subr.mxu0 0.0
        %821 = vmatpush2.msra.mxu0 0.0
        %822 = vmatprep.subr.mxu0 0.0
        %823 = vmatpush2.msra.mxu0 0.0
        %824 = vmatprep.subr.mxu0 0.0
        %825 = vmatpush2.msra.mxu0 0.0
        %826 = vmatprep.subr.mxu0 0.0
        %827 = vmatpush2.msra.mxu0 0.0
        %828 = vmatprep.subr.mxu0 0.0
        %829 = vmatpush2.msra.mxu0 0.0
        %830 = vmatprep.subr.mxu0 0.0
        %831 = vmatpush2.msra.mxu0 0.0
        %832 = vmatprep.subr.mxu0 0.0
        %833 = vmatpush2.msra.mxu0 0.0
        %834 = vmatprep.subr.mxu0 0.0
        %835 = vmatpush2.msra.mxu0 0.0
        %836 = vmatprep.subr.mxu0 0.0
        %837 = vmatpush2.msra.mxu0 0.0
        %838 = vmatprep.subr.mxu0 0.0
        %839 = vmatpush2.msra.mxu0 0.0
        %840 = vmatprep.subr.mxu0 0.0
        %841 = vmatpush2.msra.mxu0 0.0
        %842 = vmatprep.subr.mxu0 0.0
        %843 = vmatpush2.msra.mxu0 0.0
        %844 = vmatprep.subr.mxu0 0.0
        %845 = vmatpush2.msra.mxu0 0.0
        %846 = vmatprep.mubr.f32.mxu0 0.0
        %847 = vmatmul.mubr.f32.gmra.mxu0 %v624
        %v848 = vpop.f32.mrf.mxu0
        %v849 = vadd.f32 %v775, %v848
        %v850 = vpop.f32.mrf.mxu0
        %v851 = vadd.f32 %v779, %v850
        %852 = vmatprep.mubr.f32.mxu0 0.0
        %853 = vmatmul.mubr.f32.gmra.mxu0 %v625
        %v854 = vpop.f32.mrf.mxu0
        %v855 = vadd.f32 %v775, %v854
        %v856 = vpop.f32.mrf.mxu0
        %v857 = vadd.f32 %v779, %v856
        %858 = vmatprep.mubr.f32.mxu0 0.0
        %859 = vmatmul.mubr.f32.gmra.mxu0 %v626
        %v860 = vpop.f32.mrf.mxu0
        %v861 = vadd.f32 %v775, %v860
        %v862 = vpop.f32.mrf.mxu0
        %v863 = vadd.f32 %v779, %v862
        %864 = vmatprep.mubr.f32.mxu0 0.0
        %865 = vmatmul.mubr.f32.gmra.mxu0 %v627
        %v866 = vpop.f32.mrf.mxu0
        %v867 = vadd.f32 %v775, %v866
        %v868 = vpop.f32.mrf.mxu0
        %v869 = vadd.f32 %v779, %v868
        %870 = vmatprep.mubr.f32.mxu0 0.0
        %871 = vmatmul.mubr.f32.gmra.mxu0 %v628
        %v872 = vpop.f32.mrf.mxu0
        %v873 = vadd.f32 %v775, %v872
        %v874 = vpop.f32.mrf.mxu0
        %v875 = vadd.f32 %v779, %v874
        %876 = vmatprep.mubr.f32.mxu0 0.0
        %877 = vmatmul.mubr.f32.gmra.mxu0 %v629
        %v878 = vpop.f32.mrf.mxu0
        %v879 = vadd.f32 %v775, %v878
        %v880 = vpop.f32.mrf.mxu0
        %v881 = vadd.f32 %v779, %v880
        %882 = vmatprep.mubr.f32.mxu0 0.0
        %883 = vmatmul.mubr.f32.gmra.mxu0 %v630
        %v884 = vpop.f32.mrf.mxu0
        %v885 = vadd.f32 %v775, %v884
        %v886 = vpop.f32.mrf.mxu0
        %v887 = vadd.f32 %v779, %v886
        %888 = vmatprep.mubr.f32.mxu0 0.0
        %889 = vmatmul.mubr.f32.gmra.mxu0 %v631
        %v890 = vpop.f32.mrf.mxu0
        %v891 = vadd.f32 %v775, %v890
        %v892 = vpop.f32.mrf.mxu0
        %v893 = vadd.f32 %v779, %v892
        %894 = vmatprep.mubr.f32.mxu0 0.0
        %895 = vmatmul.mubr.f32.gmra.mxu0 %v632
        %v896 = vpop.f32.mrf.mxu0
        %v897 = vadd.f32 %v775, %v896
        %v898 = vpop.f32.mrf.mxu0
        %v899 = vadd.f32 %v779, %v898
        %900 = vmatprep.mubr.f32.mxu0 0.0
        %901 = vmatmul.mubr.f32.gmra.mxu0 %v633
        %v902 = vpop.f32.mrf.mxu0
        %v903 = vadd.f32 %v775, %v902
        %v904 = vpop.f32.mrf.mxu0
        %v905 = vadd.f32 %v779, %v904
        %906 = vmatprep.mubr.f32.mxu0 0.0
        %907 = vmatmul.mubr.f32.gmra.mxu0 %v634
        %v908 = vpop.f32.mrf.mxu0
        %v909 = vadd.f32 %v775, %v908
        %v910 = vpop.f32.mrf.mxu0
        %v911 = vadd.f32 %v779, %v910
        %912 = vmatprep.mubr.f32.mxu0 0.0
        %913 = vmatmul.mubr.f32.gmra.mxu0 %v635
        %v914 = vpop.f32.mrf.mxu0
        %v915 = vadd.f32 %v775, %v914
        %v916 = vpop.f32.mrf.mxu0
        %v917 = vadd.f32 %v779, %v916
        %918 = vmatprep.mubr.f32.mxu0 0.0
        %919 = vmatmul.mubr.f32.gmra.mxu0 %v636
        %v920 = vpop.f32.mrf.mxu0
        %v921 = vadd.f32 %v775, %v920
        %v922 = vpop.f32.mrf.mxu0
        %v923 = vadd.f32 %v779, %v922
        %924 = vmatprep.mubr.f32.mxu0 0.0
        %925 = vmatmul.mubr.f32.gmra.mxu0 %v637
        %v926 = vpop.f32.mrf.mxu0
        %v927 = vadd.f32 %v775, %v926
        %v928 = vpop.f32.mrf.mxu0
        %v929 = vadd.f32 %v779, %v928
        %930 = vmatprep.mubr.f32.mxu0 0.0
        %931 = vmatmul.mubr.f32.gmra.mxu0 %v638
        %v932 = vpop.f32.mrf.mxu0
        %v933 = vadd.f32 %v775, %v932
        %v934 = vpop.f32.mrf.mxu0
        %v935 = vadd.f32 %v779, %v934
        %936 = vmatprep.mubr.f32.mxu0 0.0
        %937 = vmatmul.mubr.f32.gmra.mxu0 %v639
        %v938 = vpop.f32.mrf.mxu0
        %v939 = vadd.f32 %v775, %v938
        %v940 = vpop.f32.mrf.mxu0
        %v941 = vadd.f32 %v779, %v940
        %942 = vdwg.mxu0
        %vm943 = vcmask 261120
        %v945 = vsel %vm943, %v730, 0
        %v948 = vsel %vm943, %v735, 0
        %v951 = vsel %vm943, %v849, 0
        %v954 = vsel %vm943, %v855, 0
        %v957 = vsel %vm943, %v861, 0
        %v960 = vsel %vm943, %v867, 0
        %v963 = vsel %vm943, %v873, 0
        %v966 = vsel %vm943, %v879, 0
        %v969 = vsel %vm943, %v885, 0
        %v972 = vsel %vm943, %v891, 0
        %v975 = vsel %vm943, %v897, 0
        %v978 = vsel %vm943, %v903, 0
        %v981 = vsel %vm943, %v909, 0
        %v984 = vsel %vm943, %v915, 0
        %v987 = vsel %vm943, %v921, 0
        %v990 = vsel %vm943, %v927, 0
        %v993 = vsel %vm943, %v933, 0
        %v996 = vsel %vm943, %v939, 0
        %998 = vmatprep.subr.mxu0 0.0
        %999 = vmatpush1.xpose.msra.mxu0 %v996
        %1000 = vmatprep.subr.mxu0 0.0
        %1001 = vmatpush1.xpose.msra.mxu0 %v993
        %1002 = vmatprep.subr.mxu0 0.0
        %1003 = vmatpush1.xpose.msra.mxu0 %v990
        %1004 = vmatprep.subr.mxu0 0.0
        %1005 = vmatpush1.xpose.msra.mxu0 %v987
        %1006 = vmatprep.subr.mxu0 0.0
        %1007 = vmatpush1.xpose.msra.mxu0 %v984
        %1008 = vmatprep.subr.mxu0 0.0
        %1009 = vmatpush1.xpose.msra.mxu0 %v981
        %1010 = vmatprep.subr.mxu0 0.0
        %1011 = vmatpush1.xpose.msra.mxu0 %v978
        %1012 = vmatprep.subr.mxu0 0.0
        %1013 = vmatpush1.xpose.msra.mxu0 %v975
        %1014 = vmatprep.subr.mxu0 0.0
        %1015 = vmatpush1.xpose.msra.mxu0 %v972
        %1016 = vmatprep.subr.mxu0 0.0
        %1017 = vmatpush1.xpose.msra.mxu0 %v969
        %1018 = vmatprep.subr.mxu0 0.0
        %1019 = vmatpush1.xpose.msra.mxu0 %v966
        %1020 = vmatprep.subr.mxu0 0.0
        %1021 = vmatpush1.xpose.msra.mxu0 %v963
        %1022 = vmatprep.subr.mxu0 0.0
        %1023 = vmatpush1.xpose.msra.mxu0 %v960
        %1024 = vmatprep.subr.mxu0 0.0
        %1025 = vmatpush1.xpose.msra.mxu0 %v957
        %1026 = vmatprep.subr.mxu0 0.0
        %1027 = vmatpush1.xpose.msra.mxu0 %v954
        %1028 = vmatprep.subr.mxu0 0.0
        %1029 = vmatpush1.xpose.msra.mxu0 %v951
        %1030 = vmatprep.subr.mxu0 0.0
        %1031 = vmatpush2.xpose.msra.mxu0 0.0
        %1032 = vmatprep.subr.mxu0 0.0
        %1033 = vmatpush2.xpose.msra.mxu0 0.0
        %1034 = vmatprep.subr.mxu0 0.0
        %1035 = vmatpush2.xpose.msra.mxu0 0.0
        %1036 = vmatprep.subr.mxu0 0.0
        %1037 = vmatpush2.xpose.msra.mxu0 0.0
        %1038 = vmatprep.subr.mxu0 0.0
        %1039 = vmatpush2.xpose.msra.mxu0 0.0
        %1040 = vmatprep.subr.mxu0 0.0
        %1041 = vmatpush2.xpose.msra.mxu0 0.0
        %1042 = vmatprep.subr.mxu0 0.0
        %1043 = vmatpush2.xpose.msra.mxu0 0.0
        %1044 = vmatprep.subr.mxu0 0.0
        %1045 = vmatpush2.xpose.msra.mxu0 0.0
        %1046 = vmatprep.subr.mxu0 0.0
        %1047 = vmatpush2.xpose.msra.mxu0 0.0
        %1048 = vmatprep.subr.mxu0 0.0
        %1049 = vmatpush2.xpose.msra.mxu0 0.0
        %1050 = vmatprep.subr.mxu0 0.0
        %1051 = vmatpush2.xpose.msra.mxu0 0.0
        %1052 = vmatprep.subr.mxu0 0.0
        %1053 = vmatpush2.xpose.msra.mxu0 0.0
        %1054 = vmatprep.subr.mxu0 0.0
        %1055 = vmatpush2.xpose.msra.mxu0 0.0
        %1056 = vmatprep.subr.mxu0 0.0
        %1057 = vmatpush2.xpose.msra.mxu0 0.0
        %1058 = vmatprep.subr.mxu0 0.0
        %1059 = vmatpush2.xpose.msra.mxu0 0.0
        %1060 = vmatprep.subr.mxu0 0.0
        %1061 = vmatpush2.xpose.msra.mxu0 0.0
        %1062 = vmatprep.mubr.f32.mxu0 0.0
        %1063 = vmatmul.mubr.f32.gmra.mxu0 %v945
        %v1064 = vpop.f32.mrf.mxu0
        %v1065 = vadd.f32 0.0, %v1064
        %v1066 = vpop.f32.mrf.mxu0
        %1067 = vmatprep.mubr.f32.mxu0 0.0
        %1068 = vmatmul.mubr.f32.gmra.mxu0 %v948
        %v1069 = vpop.f32.mrf.mxu0
        %v1070 = vadd.f32 0.0, %v1069
        %v1071 = vpop.f32.mrf.mxu0
        %1072 = vdwg.mxu0
        %v1073 = vmul.f32 %v1065, 0.17677669
        %v1074 = vmul.f32 %v1070, 0.17677669
        %1075 = vmax.xlane.f32.xlu0 %v1073
        %v1076 = vpop.xlane.xlu0 %1075
        %1077 = vmax.xlane.f32.xlu0 %v1074
        %v1078 = vpop.xlane.xlu0 %1077
        %v1079 = vsub.f32 %v1073, %v1076
        %v1080 = vsub.f32 %v1074, %v1078
        %v1081 = vmul.f32 %v1079, 1.442695
        %v1082 = vpow.pop %v1081
        %v1083 = vmul.f32 %v1080, 1.442695
        %v1084 = vpow.pop %v1083
        %1085 = vadd.xlane.f32.xlu0 %v1082
        %v1086 = vpop.xlane.xlu0 %1085
        %1087 = vadd.xlane.f32.xlu0 %v1084
        %v1088 = vpop.xlane.xlu0 %1087
        %v1089 = vrcp.pop %v1086
        %v1090 = vrcp.pop %v1088
        %v1091 = vmul.f32 %v1082, %v1089
        %v1092 = vmul.f32 %v1084, %v1090
        %1093 = vmatprep.subr.mxu0 0.0
        %1094 = vmatpush1.msra.mxu0 %v941
        %1095 = vmatprep.subr.mxu0 0.0
        %1096 = vmatpush1.msra.mxu0 %v935
        %1097 = vmatprep.subr.mxu0 0.0
        %1098 = vmatpush1.msra.mxu0 %v929
        %1099 = vmatprep.subr.mxu0 0.0
        %1100 = vmatpush1.msra.mxu0 %v923
        %1101 = vmatprep.subr.mxu0 0.0
        %1102 = vmatpush1.msra.mxu0 %v917
        %1103 = vmatprep.subr.mxu0 0.0
        %1104 = vmatpush1.msra.mxu0 %v911
        %1105 = vmatprep.subr.mxu0 0.0
        %1106 = vmatpush1.msra.mxu0 %v905
        %1107 = vmatprep.subr.mxu0 0.0
        %1108 = vmatpush1.msra.mxu0 %v899
        %1109 = vmatprep.subr.mxu0 0.0
        %1110 = vmatpush1.msra.mxu0 %v893
        %1111 = vmatprep.subr.mxu0 0.0
        %1112 = vmatpush1.msra.mxu0 %v887
        %1113 = vmatprep.subr.mxu0 0.0
        %1114 = vmatpush1.msra.mxu0 %v881
        %1115 = vmatprep.subr.mxu0 0.0
        %1116 = vmatpush1.msra.mxu0 %v875
        %1117 = vmatprep.subr.mxu0 0.0
        %1118 = vmatpush1.msra.mxu0 %v869
        %1119 = vmatprep.subr.mxu0 0.0
        %1120 = vmatpush1.msra.mxu0 %v863
        %1121 = vmatprep.subr.mxu0 0.0
        %1122 = vmatpush1.msra.mxu0 %v857
        %1123 = vmatprep.subr.mxu0 0.0
        %1124 = vmatpush1.msra.mxu0 %v851
        %1125 = vmatprep.subr.mxu0 0.0
        %1126 = vmatpush2.msra.mxu0 0.0
        %1127 = vmatprep.subr.mxu0 0.0
        %1128 = vmatpush2.msra.mxu0 0.0
        %1129 = vmatprep.subr.mxu0 0.0
        %1130 = vmatpush2.msra.mxu0 0.0
        %1131 = vmatprep.subr.mxu0 0.0
        %1132 = vmatpush2.msra.mxu0 0.0
        %1133 = vmatprep.subr.mxu0 0.0
        %1134 = vmatpush2.msra.mxu0 0.0
        %1135 = vmatprep.subr.mxu0 0.0
        %1136 = vmatpush2.msra.mxu0 0.0
        %1137 = vmatprep.subr.mxu0 0.0
        %1138 = vmatpush2.msra.mxu0 0.0
        %1139 = vmatprep.subr.mxu0 0.0
        %1140 = vmatpush2.msra.mxu0 0.0
        %1141 = vmatprep.subr.mxu0 0.0
        %1142 = vmatpush2.msra.mxu0 0.0
        %1143 = vmatprep.subr.mxu0 0.0
        %1144 = vmatpush2.msra.mxu0 0.0
        %1145 = vmatprep.subr.mxu0 0.0
        %1146 = vmatpush2.msra.mxu0 0.0
        %1147 = vmatprep.subr.mxu0 0.0
        %1148 = vmatpush2.msra.mxu0 0.0
        %1149 = vmatprep.subr.mxu0 0.0
        %1150 = vmatpush2.msra.mxu0 0.0
        %1151 = vmatprep.subr.mxu0 0.0
        %1152 = vmatpush2.msra.mxu0 0.0
        %1153 = vmatprep.subr.mxu0 0.0
        %1154 = vmatpush2.msra.mxu0 0.0
        %1155 = vmatprep.subr.mxu0 0.0
        %1156 = vmatpush2.msra.mxu0 0.0
        %1157 = vmatprep.mubr.f32.mxu0 0.0
        %1158 = vmatmul.mubr.f32.gmra.mxu0 %v1091
        %v1159 = vpop.f32.mrf.mxu0
        %v1160 = vadd.f32 0.0, %v1159
        %v1161 = vpop.f32.mrf.mxu0
        %1162 = vmatprep.mubr.f32.mxu0 0.0
        %1163 = vmatmul.mubr.f32.gmra.mxu0 %v1092
        %v1164 = vpop.f32.mrf.mxu0
        %v1165 = vadd.f32 0.0, %v1164
        %v1166 = vpop.f32.mrf.mxu0
        %1167 = vdwg.mxu0
        %1168 = vrot.lane.b32.xlu0 %v730, 96
        %v1169 = vpop.permute.xlu0 %1168
        %1170 = vrot.lane.b32.xlu0 %v735, 96
        %v1171 = vpop.permute.xlu0 %1170
        %1172 = vrot.lane.b32.xlu0 %v849, 96
        %v1173 = vpop.permute.xlu0 %1172
        %1174 = vrot.lane.b32.xlu0 %v855, 96
        %v1175 = vpop.permute.xlu0 %1174
        %1176 = vrot.lane.b32.xlu0 %v861, 96
        %v1177 = vpop.permute.xlu0 %1176
        %1178 = vrot.lane.b32.xlu0 %v867, 96
        %v1179 = vpop.permute.xlu0 %1178
        %1180 = vrot.lane.b32.xlu0 %v873, 96
        %v1181 = vpop.permute.xlu0 %1180
        %1182 = vrot.lane.b32.xlu0 %v879, 96
        %v1183 = vpop.permute.xlu0 %1182
        %1184 = vrot.lane.b32.xlu0 %v885, 96
        %v1185 = vpop.permute.xlu0 %1184
        %1186 = vrot.lane.b32.xlu0 %v891, 96
        %v1187 = vpop.permute.xlu0 %1186
        %1188 = vrot.lane.b32.xlu0 %v897, 96
        %v1189 = vpop.permute.xlu0 %1188
        %1190 = vrot.lane.b32.xlu0 %v903, 96
        %v1191 = vpop.permute.xlu0 %1190
        %1192 = vrot.lane.b32.xlu0 %v909, 96
        %v1193 = vpop.permute.xlu0 %1192
        %1194 = vrot.lane.b32.xlu0 %v915, 96
        %v1195 = vpop.permute.xlu0 %1194
        %1196 = vrot.lane.b32.xlu0 %v921, 96
        %v1197 = vpop.permute.xlu0 %1196
        %1198 = vrot.lane.b32.xlu0 %v927, 96
        %v1199 = vpop.permute.xlu0 %1198
        %1200 = vrot.lane.b32.xlu0 %v933, 96
        %v1201 = vpop.permute.xlu0 %1200
        %1202 = vrot.lane.b32.xlu0 %v939, 96
        %v1203 = vpop.permute.xlu0 %1202
        %v1204 = vsel %vm943, %v1169, 0
        %v1206 = vsel %vm943, %v1171, 0
        %v1208 = vsel %vm943, %v1173, 0
        %v1210 = vsel %vm943, %v1175, 0
        %v1212 = vsel %vm943, %v1177, 0
        %v1214 = vsel %vm943, %v1179, 0
        %v1216 = vsel %vm943, %v1181, 0
        %v1218 = vsel %vm943, %v1183, 0
        %v1220 = vsel %vm943, %v1185, 0
        %v1222 = vsel %vm943, %v1187, 0
        %v1224 = vsel %vm943, %v1189, 0
        %v1226 = vsel %vm943, %v1191, 0
        %v1228 = vsel %vm943, %v1193, 0
        %v1230 = vsel %vm943, %v1195, 0
        %v1232 = vsel %vm943, %v1197, 0
        %v1234 = vsel %vm943, %v1199, 0
        %v1236 = vsel %vm943, %v1201, 0
        %v1238 = vsel %vm943, %v1203, 0
        %1240 = vmatprep.subr.mxu0 0.0
        %1241 = vmatpush1.xpose.msra.mxu0 %v1238
        %1242 = vmatprep.subr.mxu0 0.0
        %1243 = vmatpush1.xpose.msra.mxu0 %v1236
        %1244 = vmatprep.subr.mxu0 0.0
        %1245 = vmatpush1.xpose.msra.mxu0 %v1234
        %1246 = vmatprep.subr.mxu0 0.0
        %1247 = vmatpush1.xpose.msra.mxu0 %v1232
        %1248 = vmatprep.subr.mxu0 0.0
        %1249 = vmatpush1.xpose.msra.mxu0 %v1230
        %1250 = vmatprep.subr.mxu0 0.0
        %1251 = vmatpush1.xpose.msra.mxu0 %v1228
        %1252 = vmatprep.subr.mxu0 0.0
        %1253 = vmatpush1.xpose.msra.mxu0 %v1226
        %1254 = vmatprep.subr.mxu0 0.0
        %1255 = vmatpush1.xpose.msra.mxu0 %v1224
        %1256 = vmatprep.subr.mxu0 0.0
        %1257 = vmatpush1.xpose.msra.mxu0 %v1222
        %1258 = vmatprep.subr.mxu0 0.0
        %1259 = vmatpush1.xpose.msra.mxu0 %v1220
        %1260 = vmatprep.subr.mxu0 0.0
        %1261 = vmatpush1.xpose.msra.mxu0 %v1218
        %1262 = vmatprep.subr.mxu0 0.0
        %1263 = vmatpush1.xpose.msra.mxu0 %v1216
        %1264 = vmatprep.subr.mxu0 0.0
        %1265 = vmatpush1.xpose.msra.mxu0 %v1214
        %1266 = vmatprep.subr.mxu0 0.0
        %1267 = vmatpush1.xpose.msra.mxu0 %v1212
        %1268 = vmatprep.subr.mxu0 0.0
        %1269 = vmatpush1.xpose.msra.mxu0 %v1210
        %1270 = vmatprep.subr.mxu0 0.0
        %1271 = vmatpush1.xpose.msra.mxu0 %v1208
        %1272 = vmatprep.subr.mxu0 0.0
        %1273 = vmatpush2.xpose.msra.mxu0 0.0
        %1274 = vmatprep.subr.mxu0 0.0
        %1275 = vmatpush2.xpose.msra.mxu0 0.0
        %1276 = vmatprep.subr.mxu0 0.0
        %1277 = vmatpush2.xpose.msra.mxu0 0.0
        %1278 = vmatprep.subr.mxu0 0.0
        %1279 = vmatpush2.xpose.msra.mxu0 0.0
        %1280 = vmatprep.subr.mxu0 0.0
        %1281 = vmatpush2.xpose.msra.mxu0 0.0
        %1282 = vmatprep.subr.mxu0 0.0
        %1283 = vmatpush2.xpose.msra.mxu0 0.0
        %1284 = vmatprep.subr.mxu0 0.0
        %1285 = vmatpush2.xpose.msra.mxu0 0.0
        %1286 = vmatprep.subr.mxu0 0.0
        %1287 = vmatpush2.xpose.msra.mxu0 0.0
        %1288 = vmatprep.subr.mxu0 0.0
        %1289 = vmatpush2.xpose.msra.mxu0 0.0
        %1290 = vmatprep.subr.mxu0 0.0
        %1291 = vmatpush2.xpose.msra.mxu0 0.0
        %1292 = vmatprep.subr.mxu0 0.0
        %1293 = vmatpush2.xpose.msra.mxu0 0.0
        %1294 = vmatprep.subr.mxu0 0.0
        %1295 = vmatpush2.xpose.msra.mxu0 0.0
        %1296 = vmatprep.subr.mxu0 0.0
        %1297 = vmatpush2.xpose.msra.mxu0 0.0
        %1298 = vmatprep.subr.mxu0 0.0
        %1299 = vmatpush2.xpose.msra.mxu0 0.0
        %1300 = vmatprep.subr.mxu0 0.0
        %1301 = vmatpush2.xpose.msra.mxu0 0.0
        %1302 = vmatprep.subr.mxu0 0.0
        %1303 = vmatpush2.xpose.msra.mxu0 0.0
        %1304 = vmatprep.mubr.f32.mxu0 0.0
        %1305 = vmatmul.mubr.f32.gmra.mxu0 %v1204
        %v1306 = vpop.f32.mrf.mxu0
        %v1307 = vadd.f32 0.0, %v1306
        %v1308 = vpop.f32.mrf.mxu0
        %1309 = vmatprep.mubr.f32.mxu0 0.0
        %1310 = vmatmul.mubr.f32.gmra.mxu0 %v1206
        %v1311 = vpop.f32.mrf.mxu0
        %v1312 = vadd.f32 0.0, %v1311
        %v1313 = vpop.f32.mrf.mxu0
        %1314 = vdwg.mxu0
        %v1315 = vmul.f32 %v1307, 0.17677669
        %v1316 = vmul.f32 %v1312, 0.17677669
        %1317 = vmax.xlane.f32.xlu0 %v1315
        %v1318 = vpop.xlane.xlu0 %1317
        %1319 = vmax.xlane.f32.xlu0 %v1316
        %v1320 = vpop.xlane.xlu0 %1319
        %v1321 = vsub.f32 %v1315, %v1318
        %v1322 = vsub.f32 %v1316, %v1320
        %v1323 = vmul.f32 %v1321, 1.442695
        %v1324 = vpow.pop %v1323
        %v1325 = vmul.f32 %v1322, 1.442695
        %v1326 = vpow.pop %v1325
        %1327 = vadd.xlane.f32.xlu0 %v1324
        %v1328 = vpop.xlane.xlu0 %1327
        %1329 = vadd.xlane.f32.xlu0 %v1326
        %v1330 = vpop.xlane.xlu0 %1329
        %v1331 = vrcp.pop %v1328
        %v1332 = vrcp.pop %v1330
        %v1333 = vmul.f32 %v1324, %v1331
        %v1334 = vmul.f32 %v1326, %v1332
        %v1335 = vadd.f32 %v1091, %v1333
        %v1336 = vadd.f32 %v1092, %v1334
        %1353 = vrot.lane.b32.xlu0 %v851, 96
        %v1354 = vpop.permute.xlu0 %1353
        %1355 = vrot.lane.b32.xlu0 %v857, 96
        %v1356 = vpop.permute.xlu0 %1355
        %1357 = vrot.lane.b32.xlu0 %v863, 96
        %v1358 = vpop.permute.xlu0 %1357
        %1359 = vrot.lane.b32.xlu0 %v869, 96
        %v1360 = vpop.permute.xlu0 %1359
        %1361 = vrot.lane.b32.xlu0 %v875, 96
        %v1362 = vpop.permute.xlu0 %1361
        %1363 = vrot.lane.b32.xlu0 %v881, 96
        %v1364 = vpop.permute.xlu0 %1363
        %1365 = vrot.lane.b32.xlu0 %v887, 96
        %v1366 = vpop.permute.xlu0 %1365
        %1367 = vrot.lane.b32.xlu0 %v893, 96
        %v1368 = vpop.permute.xlu0 %1367
        %1369 = vrot.lane.b32.xlu0 %v899, 96
        %v1370 = vpop.permute.xlu0 %1369
        %1371 = vrot.lane.b32.xlu0 %v905, 96
        %v1372 = vpop.permute.xlu0 %1371
        %1373 = vrot.lane.b32.xlu0 %v911, 96
        %v1374 = vpop.permute.xlu0 %1373
        %1375 = vrot.lane.b32.xlu0 %v917, 96
        %v1376 = vpop.permute.xlu0 %1375
        %1377 = vrot.lane.b32.xlu0 %v923, 96
        %v1378 = vpop.permute.xlu0 %1377
        %1379 = vrot.lane.b32.xlu0 %v929, 96
        %v1380 = vpop.permute.xlu0 %1379
        %1381 = vrot.lane.b32.xlu0 %v935, 96
        %v1382 = vpop.permute.xlu0 %1381
        %1383 = vrot.lane.b32.xlu0 %v941, 96
        %v1384 = vpop.permute.xlu0 %1383
        %1401 = vmatprep.subr.mxu0 0.0
        %1402 = vmatpush1.msra.mxu0 %v1384
        %1403 = vmatprep.subr.mxu0 0.0
        %1404 = vmatpush1.msra.mxu0 %v1382
        %1405 = vmatprep.subr.mxu0 0.0
        %1406 = vmatpush1.msra.mxu0 %v1380
        %1407 = vmatprep.subr.mxu0 0.0
        %1408 = vmatpush1.msra.mxu0 %v1378
        %1409 = vmatprep.subr.mxu0 0.0
        %1410 = vmatpush1.msra.mxu0 %v1376
        %1411 = vmatprep.subr.mxu0 0.0
        %1412 = vmatpush1.msra.mxu0 %v1374
        %1413 = vmatprep.subr.mxu0 0.0
        %1414 = vmatpush1.msra.mxu0 %v1372
        %1415 = vmatprep.subr.mxu0 0.0
        %1416 = vmatpush1.msra.mxu0 %v1370
        %1417 = vmatprep.subr.mxu0 0.0
        %1418 = vmatpush1.msra.mxu0 %v1368
        %1419 = vmatprep.subr.mxu0 0.0
        %1420 = vmatpush1.msra.mxu0 %v1366
        %1421 = vmatprep.subr.mxu0 0.0
        %1422 = vmatpush1.msra.mxu0 %v1364
        %1423 = vmatprep.subr.mxu0 0.0
        %1424 = vmatpush1.msra.mxu0 %v1362
        %1425 = vmatprep.subr.mxu0 0.0
        %1426 = vmatpush1.msra.mxu0 %v1360
        %1427 = vmatprep.subr.mxu0 0.0
        %1428 = vmatpush1.msra.mxu0 %v1358
        %1429 = vmatprep.subr.mxu0 0.0
        %1430 = vmatpush1.msra.mxu0 %v1356
        %1431 = vmatprep.subr.mxu0 0.0
        %1432 = vmatpush1.msra.mxu0 %v1354
        %1433 = vmatprep.subr.mxu0 0.0
        %1434 = vmatpush2.msra.mxu0 0.0
        %1435 = vmatprep.subr.mxu0 0.0
        %1436 = vmatpush2.msra.mxu0 0.0
        %1437 = vmatprep.subr.mxu0 0.0
        %1438 = vmatpush2.msra.mxu0 0.0
        %1439 = vmatprep.subr.mxu0 0.0
        %1440 = vmatpush2.msra.mxu0 0.0
        %1441 = vmatprep.subr.mxu0 0.0
        %1442 = vmatpush2.msra.mxu0 0.0
        %1443 = vmatprep.subr.mxu0 0.0
        %1444 = vmatpush2.msra.mxu0 0.0
        %1445 = vmatprep.subr.mxu0 0.0
        %1446 = vmatpush2.msra.mxu0 0.0
        %1447 = vmatprep.subr.mxu0 0.0
        %1448 = vmatpush2.msra.mxu0 0.0
        %1449 = vmatprep.subr.mxu0 0.0
        %1450 = vmatpush2.msra.mxu0 0.0
        %1451 = vmatprep.subr.mxu0 0.0
        %1452 = vmatpush2.msra.mxu0 0.0
        %1453 = vmatprep.subr.mxu0 0.0
        %1454 = vmatpush2.msra.mxu0 0.0
        %1455 = vmatprep.subr.mxu0 0.0
        %1456 = vmatpush2.msra.mxu0 0.0
        %1457 = vmatprep.subr.mxu0 0.0
        %1458 = vmatpush2.msra.mxu0 0.0
        %1459 = vmatprep.subr.mxu0 0.0
        %1460 = vmatpush2.msra.mxu0 0.0
        %1461 = vmatprep.subr.mxu0 0.0
        %1462 = vmatpush2.msra.mxu0 0.0
        %1463 = vmatprep.subr.mxu0 0.0
        %1464 = vmatpush2.msra.mxu0 0.0
        %1465 = vmatprep.mubr.f32.mxu0 0.0
        %1466 = vmatmul.mubr.f32.gmra.mxu0 %v1333
        %v1467 = vpop.f32.mrf.mxu0
        %v1468 = vadd.f32 0.0, %v1467
        %v1469 = vpop.f32.mrf.mxu0
        %1470 = vmatprep.mubr.f32.mxu0 0.0
        %1471 = vmatmul.mubr.f32.gmra.mxu0 %v1334
        %v1472 = vpop.f32.mrf.mxu0
        %v1473 = vadd.f32 0.0, %v1472
        %v1474 = vpop.f32.mrf.mxu0
        %1475 = vdwg.mxu0
        %1476 = vrot.lane.b32.xlu0 %v730, 64
        %v1477 = vpop.permute.xlu0 %1476
        %1478 = vrot.lane.b32.xlu0 %v735, 64
        %v1479 = vpop.permute.xlu0 %1478
        %1480 = vrot.lane.b32.xlu0 %v849, 64
        %v1481 = vpop.permute.xlu0 %1480
        %1482 = vrot.lane.b32.xlu0 %v855, 64
        %v1483 = vpop.permute.xlu0 %1482
        %1484 = vrot.lane.b32.xlu0 %v861, 64
        %v1485 = vpop.permute.xlu0 %1484
        %1486 = vrot.lane.b32.xlu0 %v867, 64
        %v1487 = vpop.permute.xlu0 %1486
        %1488 = vrot.lane.b32.xlu0 %v873, 64
        %v1489 = vpop.permute.xlu0 %1488
        %1490 = vrot.lane.b32.xlu0 %v879, 64
        %v1491 = vpop.permute.xlu0 %1490
        %1492 = vrot.lane.b32.xlu0 %v885, 64
        %v1493 = vpop.permute.xlu0 %1492
        %1494 = vrot.lane.b32.xlu0 %v891, 64
        %v1495 = vpop.permute.xlu0 %1494
        %1496 = vrot.lane.b32.xlu0 %v897, 64
        %v1497 = vpop.permute.xlu0 %1496
        %1498 = vrot.lane.b32.xlu0 %v903, 64
        %v1499 = vpop.permute.xlu0 %1498
        %1500 = vrot.lane.b32.xlu0 %v909, 64
        %v1501 = vpop.permute.xlu0 %1500
        %1502 = vrot.lane.b32.xlu0 %v915, 64
        %v1503 = vpop.permute.xlu0 %1502
        %1504 = vrot.lane.b32.xlu0 %v921, 64
        %v1505 = vpop.permute.xlu0 %1504
        %1506 = vrot.lane.b32.xlu0 %v927, 64
        %v1507 = vpop.permute.xlu0 %1506
        %1508 = vrot.lane.b32.xlu0 %v933, 64
        %v1509 = vpop.permute.xlu0 %1508
        %1510 = vrot.lane.b32.xlu0 %v939, 64
        %v1511 = vpop.permute.xlu0 %1510
        %v1512 = vsel %vm943, %v1477, 0
        %v1514 = vsel %vm943, %v1479, 0
        %v1516 = vsel %vm943, %v1481, 0
        %v1518 = vsel %vm943, %v1483, 0
        %v1520 = vsel %vm943, %v1485, 0
        %v1522 = vsel %vm943, %v1487, 0
        %v1524 = vsel %vm943, %v1489, 0
        %v1526 = vsel %vm943, %v1491, 0
        %v1528 = vsel %vm943, %v1493, 0
        %v1530 = vsel %vm943, %v1495, 0
        %v1532 = vsel %vm943, %v1497, 0
        %v1534 = vsel %vm943, %v1499, 0
        %v1536 = vsel %vm943, %v1501, 0
        %v1538 = vsel %vm943, %v1503, 0
        %v1540 = vsel %vm943, %v1505, 0
        %v1542 = vsel %vm943, %v1507, 0
        %v1544 = vsel %vm943, %v1509, 0
        %v1546 = vsel %vm943, %v1511, 0
        %1548 = vmatprep.subr.mxu0 0.0
        %1549 = vmatpush1.xpose.msra.mxu0 %v1546
        %1550 = vmatprep.subr.mxu0 0.0
        %1551 = vmatpush1.xpose.msra.mxu0 %v1544
        %1552 = vmatprep.subr.mxu0 0.0
        %1553 = vmatpush1.xpose.msra.mxu0 %v1542
        %1554 = vmatprep.subr.mxu0 0.0
        %1555 = vmatpush1.xpose.msra.mxu0 %v1540
        %1556 = vmatprep.subr.mxu0 0.0
        %1557 = vmatpush1.xpose.msra.mxu0 %v1538
        %1558 = vmatprep.subr.mxu0 0.0
        %1559 = vmatpush1.xpose.msra.mxu0 %v1536
        %1560 = vmatprep.subr.mxu0 0.0
        %1561 = vmatpush1.xpose.msra.mxu0 %v1534
        %1562 = vmatprep.subr.mxu0 0.0
        %1563 = vmatpush1.xpose.msra.mxu0 %v1532
        %1564 = vmatprep.subr.mxu0 0.0
        %1565 = vmatpush1.xpose.msra.mxu0 %v1530
        %1566 = vmatprep.subr.mxu0 0.0
        %1567 = vmatpush1.xpose.msra.mxu0 %v1528
        %1568 = vmatprep.subr.mxu0 0.0
        %1569 = vmatpush1.xpose.msra.mxu0 %v1526
        %1570 = vmatprep.subr.mxu0 0.0
        %1571 = vmatpush1.xpose.msra.mxu0 %v1524
        %1572 = vmatprep.subr.mxu0 0.0
        %1573 = vmatpush1.xpose.msra.mxu0 %v1522
        %1574 = vmatprep.subr.mxu0 0.0
        %1575 = vmatpush1.xpose.msra.mxu0 %v1520
        %1576 = vmatprep.subr.mxu0 0.0
        %1577 = vmatpush1.xpose.msra.mxu0 %v1518
        %1578 = vmatprep.subr.mxu0 0.0
        %1579 = vmatpush1.xpose.msra.mxu0 %v1516
        %1580 = vmatprep.subr.mxu0 0.0
        %1581 = vmatpush2.xpose.msra.mxu0 0.0
        %1582 = vmatprep.subr.mxu0 0.0
        %1583 = vmatpush2.xpose.msra.mxu0 0.0
        %1584 = vmatprep.subr.mxu0 0.0
        %1585 = vmatpush2.xpose.msra.mxu0 0.0
        %1586 = vmatprep.subr.mxu0 0.0
        %1587 = vmatpush2.xpose.msra.mxu0 0.0
        %1588 = vmatprep.subr.mxu0 0.0
        %1589 = vmatpush2.xpose.msra.mxu0 0.0
        %1590 = vmatprep.subr.mxu0 0.0
        %1591 = vmatpush2.xpose.msra.mxu0 0.0
        %1592 = vmatprep.subr.mxu0 0.0
        %1593 = vmatpush2.xpose.msra.mxu0 0.0
        %1594 = vmatprep.subr.mxu0 0.0
        %1595 = vmatpush2.xpose.msra.mxu0 0.0
        %1596 = vmatprep.subr.mxu0 0.0
        %1597 = vmatpush2.xpose.msra.mxu0 0.0
        %1598 = vmatprep.subr.mxu0 0.0
        %1599 = vmatpush2.xpose.msra.mxu0 0.0
        %1600 = vmatprep.subr.mxu0 0.0
        %1601 = vmatpush2.xpose.msra.mxu0 0.0
        %1602 = vmatprep.subr.mxu0 0.0
        %1603 = vmatpush2.xpose.msra.mxu0 0.0
        %1604 = vmatprep.subr.mxu0 0.0
        %1605 = vmatpush2.xpose.msra.mxu0 0.0
        %1606 = vmatprep.subr.mxu0 0.0
        %1607 = vmatpush2.xpose.msra.mxu0 0.0
        %1608 = vmatprep.subr.mxu0 0.0
        %1609 = vmatpush2.xpose.msra.mxu0 0.0
        %1610 = vmatprep.subr.mxu0 0.0
        %1611 = vmatpush2.xpose.msra.mxu0 0.0
        %1612 = vmatprep.mubr.f32.mxu0 0.0
        %1613 = vmatmul.mubr.f32.gmra.mxu0 %v1512
        %v1614 = vpop.f32.mrf.mxu0
        %v1615 = vadd.f32 0.0, %v1614
        %v1616 = vpop.f32.mrf.mxu0
        %1617 = vmatprep.mubr.f32.mxu0 0.0
        %1618 = vmatmul.mubr.f32.gmra.mxu0 %v1514
        %v1619 = vpop.f32.mrf.mxu0
        %v1620 = vadd.f32 0.0, %v1619
        %v1621 = vpop.f32.mrf.mxu0
        %1622 = vdwg.mxu0
        %v1623 = vmul.f32 %v1615, 0.17677669
        %v1624 = vmul.f32 %v1620, 0.17677669
        %1625 = vmax.xlane.f32.xlu0 %v1623
        %v1626 = vpop.xlane.xlu0 %1625
        %1627 = vmax.xlane.f32.xlu0 %v1624
        %v1628 = vpop.xlane.xlu0 %1627
        %v1629 = vsub.f32 %v1623, %v1626
        %v1630 = vsub.f32 %v1624, %v1628
        %v1631 = vmul.f32 %v1629, 1.442695
        %v1632 = vpow.pop %v1631
        %v1633 = vmul.f32 %v1630, 1.442695
        %v1634 = vpow.pop %v1633
        %1635 = vadd.xlane.f32.xlu0 %v1632
        %v1636 = vpop.xlane.xlu0 %1635
        %1637 = vadd.xlane.f32.xlu0 %v1634
        %v1638 = vpop.xlane.xlu0 %1637
        %v1639 = vrcp.pop %v1636
        %v1640 = vrcp.pop %v1638
        %v1641 = vmul.f32 %v1632, %v1639
        %v1642 = vmul.f32 %v1634, %v1640
        %v1643 = vadd.f32 %v1335, %v1641
        %v1644 = vadd.f32 %v1336, %v1642
        %1645 = vrot.lane.b32.xlu0 %v851, 64
        %v1646 = vpop.permute.xlu0 %1645
        %1647 = vrot.lane.b32.xlu0 %v857, 64
        %v1648 = vpop.permute.xlu0 %1647
        %1649 = vrot.lane.b32.xlu0 %v863, 64
        %v1650 = vpop.permute.xlu0 %1649
        %1651 = vrot.lane.b32.xlu0 %v869, 64
        %v1652 = vpop.permute.xlu0 %1651
        %1653 = vrot.lane.b32.xlu0 %v875, 64
        %v1654 = vpop.permute.xlu0 %1653
        %1655 = vrot.lane.b32.xlu0 %v881, 64
        %v1656 = vpop.permute.xlu0 %1655
        %1657 = vrot.lane.b32.xlu0 %v887, 64
        %v1658 = vpop.permute.xlu0 %1657
        %1659 = vrot.lane.b32.xlu0 %v893, 64
        %v1660 = vpop.permute.xlu0 %1659
        %1661 = vrot.lane.b32.xlu0 %v899, 64
        %v1662 = vpop.permute.xlu0 %1661
        %1663 = vrot.lane.b32.xlu0 %v905, 64
        %v1664 = vpop.permute.xlu0 %1663
        %1665 = vrot.lane.b32.xlu0 %v911, 64
        %v1666 = vpop.permute.xlu0 %1665
        %1667 = vrot.lane.b32.xlu0 %v917, 64
        %v1668 = vpop.permute.xlu0 %1667
        %1669 = vrot.lane.b32.xlu0 %v923, 64
        %v1670 = vpop.permute.xlu0 %1669
        %1671 = vrot.lane.b32.xlu0 %v929, 64
        %v1672 = vpop.permute.xlu0 %1671
        %1673 = vrot.lane.b32.xlu0 %v935, 64
        %v1674 = vpop.permute.xlu0 %1673
        %1675 = vrot.lane.b32.xlu0 %v941, 64
        %v1676 = vpop.permute.xlu0 %1675
        %1693 = vmatprep.subr.mxu0 0.0
        %1694 = vmatpush1.msra.mxu0 %v1676
        %1695 = vmatprep.subr.mxu0 0.0
        %1696 = vmatpush1.msra.mxu0 %v1674
        %1697 = vmatprep.subr.mxu0 0.0
        %1698 = vmatpush1.msra.mxu0 %v1672
        %1699 = vmatprep.subr.mxu0 0.0
        %1700 = vmatpush1.msra.mxu0 %v1670
        %1701 = vmatprep.subr.mxu0 0.0
        %1702 = vmatpush1.msra.mxu0 %v1668
        %1703 = vmatprep.subr.mxu0 0.0
        %1704 = vmatpush1.msra.mxu0 %v1666
        %1705 = vmatprep.subr.mxu0 0.0
        %1706 = vmatpush1.msra.mxu0 %v1664
        %1707 = vmatprep.subr.mxu0 0.0
        %1708 = vmatpush1.msra.mxu0 %v1662
        %1709 = vmatprep.subr.mxu0 0.0
        %1710 = vmatpush1.msra.mxu0 %v1660
        %1711 = vmatprep.subr.mxu0 0.0
        %1712 = vmatpush1.msra.mxu0 %v1658
        %1713 = vmatprep.subr.mxu0 0.0
        %1714 = vmatpush1.msra.mxu0 %v1656
        %1715 = vmatprep.subr.mxu0 0.0
        %1716 = vmatpush1.msra.mxu0 %v1654
        %1717 = vmatprep.subr.mxu0 0.0
        %1718 = vmatpush1.msra.mxu0 %v1652
        %1719 = vmatprep.subr.mxu0 0.0
        %1720 = vmatpush1.msra.mxu0 %v1650
        %1721 = vmatprep.subr.mxu0 0.0
        %1722 = vmatpush1.msra.mxu0 %v1648
        %1723 = vmatprep.subr.mxu0 0.0
        %1724 = vmatpush1.msra.mxu0 %v1646
        %1725 = vmatprep.subr.mxu0 0.0
        %1726 = vmatpush2.msra.mxu0 0.0
        %1727 = vmatprep.subr.mxu0 0.0
        %1728 = vmatpush2.msra.mxu0 0.0
        %1729 = vmatprep.subr.mxu0 0.0
        %1730 = vmatpush2.msra.mxu0 0.0
        %1731 = vmatprep.subr.mxu0 0.0
        %1732 = vmatpush2.msra.mxu0 0.0
        %1733 = vmatprep.subr.mxu0 0.0
        %1734 = vmatpush2.msra.mxu0 0.0
        %1735 = vmatprep.subr.mxu0 0.0
        %1736 = vmatpush2.msra.mxu0 0.0
        %1737 = vmatprep.subr.mxu0 0.0
        %1738 = vmatpush2.msra.mxu0 0.0
        %1739 = vmatprep.subr.mxu0 0.0
        %1740 = vmatpush2.msra.mxu0 0.0
        %1741 = vmatprep.subr.mxu0 0.0
        %1742 = vmatpush2.msra.mxu0 0.0
        %1743 = vmatprep.subr.mxu0 0.0
        %1744 = vmatpush2.msra.mxu0 0.0
        %1745 = vmatprep.subr.mxu0 0.0
        %1746 = vmatpush2.msra.mxu0 0.0
        %1747 = vmatprep.subr.mxu0 0.0
        %1748 = vmatpush2.msra.mxu0 0.0
        %1749 = vmatprep.subr.mxu0 0.0
        %1750 = vmatpush2.msra.mxu0 0.0
        %1751 = vmatprep.subr.mxu0 0.0
        %1752 = vmatpush2.msra.mxu0 0.0
        %1753 = vmatprep.subr.mxu0 0.0
        %1754 = vmatpush2.msra.mxu0 0.0
        %1755 = vmatprep.subr.mxu0 0.0
        %1756 = vmatpush2.msra.mxu0 0.0
        %1757 = vmatprep.mubr.f32.mxu0 0.0
        %1758 = vmatmul.mubr.f32.gmra.mxu0 %v1641
        %v1759 = vpop.f32.mrf.mxu0
        %v1760 = vadd.f32 0.0, %v1759
        %v1761 = vpop.f32.mrf.mxu0
        %1762 = vmatprep.mubr.f32.mxu0 0.0
        %1763 = vmatmul.mubr.f32.gmra.mxu0 %v1642
        %v1764 = vpop.f32.mrf.mxu0
        %v1765 = vadd.f32 0.0, %v1764
        %v1766 = vpop.f32.mrf.mxu0
        %1767 = vdwg.mxu0
        %1768 = vrot.lane.b32.xlu0 %v730, 32
        %v1769 = vpop.permute.xlu0 %1768
        %1770 = vrot.lane.b32.xlu0 %v735, 32
        %v1771 = vpop.permute.xlu0 %1770
        %1772 = vrot.lane.b32.xlu0 %v849, 32
        %v1773 = vpop.permute.xlu0 %1772
        %1774 = vrot.lane.b32.xlu0 %v855, 32
        %v1775 = vpop.permute.xlu0 %1774
        %1776 = vrot.lane.b32.xlu0 %v861, 32
        %v1777 = vpop.permute.xlu0 %1776
        %1778 = vrot.lane.b32.xlu0 %v867, 32
        %v1779 = vpop.permute.xlu0 %1778
        %1780 = vrot.lane.b32.xlu0 %v873, 32
        %v1781 = vpop.permute.xlu0 %1780
        %1782 = vrot.lane.b32.xlu0 %v879, 32
        %v1783 = vpop.permute.xlu0 %1782
        %1784 = vrot.lane.b32.xlu0 %v885, 32
        %v1785 = vpop.permute.xlu0 %1784
        %1786 = vrot.lane.b32.xlu0 %v891, 32
        %v1787 = vpop.permute.xlu0 %1786
        %1788 = vrot.lane.b32.xlu0 %v897, 32
        %v1789 = vpop.permute.xlu0 %1788
        %1790 = vrot.lane.b32.xlu0 %v903, 32
        %v1791 = vpop.permute.xlu0 %1790
        %1792 = vrot.lane.b32.xlu0 %v909, 32
        %v1793 = vpop.permute.xlu0 %1792
        %1794 = vrot.lane.b32.xlu0 %v915, 32
        %v1795 = vpop.permute.xlu0 %1794
        %1796 = vrot.lane.b32.xlu0 %v921, 32
        %v1797 = vpop.permute.xlu0 %1796
        %1798 = vrot.lane.b32.xlu0 %v927, 32
        %v1799 = vpop.permute.xlu0 %1798
        %1800 = vrot.lane.b32.xlu0 %v933, 32
        %v1801 = vpop.permute.xlu0 %1800
        %1802 = vrot.lane.b32.xlu0 %v939, 32
        %v1803 = vpop.permute.xlu0 %1802
        %v1804 = vsel %vm943, %v1769, 0
        %v1806 = vsel %vm943, %v1771, 0
        %v1808 = vsel %vm943, %v1773, 0
        %v1810 = vsel %vm943, %v1775, 0
        %v1812 = vsel %vm943, %v1777, 0
        %v1814 = vsel %vm943, %v1779, 0
        %v1816 = vsel %vm943, %v1781, 0
        %v1818 = vsel %vm943, %v1783, 0
        %v1820 = vsel %vm943, %v1785, 0
        %v1822 = vsel %vm943, %v1787, 0
        %v1824 = vsel %vm943, %v1789, 0
        %v1826 = vsel %vm943, %v1791, 0
        %v1828 = vsel %vm943, %v1793, 0
        %v1830 = vsel %vm943, %v1795, 0
        %v1832 = vsel %vm943, %v1797, 0
        %v1834 = vsel %vm943, %v1799, 0
        %v1836 = vsel %vm943, %v1801, 0
        %v1838 = vsel %vm943, %v1803, 0
        %1840 = vmatprep.subr.mxu0 0.0
        %1841 = vmatpush1.xpose.msra.mxu0 %v1838
        %1842 = vmatprep.subr.mxu0 0.0
        %1843 = vmatpush1.xpose.msra.mxu0 %v1836
        %1844 = vmatprep.subr.mxu0 0.0
        %1845 = vmatpush1.xpose.msra.mxu0 %v1834
        %1846 = vmatprep.subr.mxu0 0.0
        %1847 = vmatpush1.xpose.msra.mxu0 %v1832
        %1848 = vmatprep.subr.mxu0 0.0
        %1849 = vmatpush1.xpose.msra.mxu0 %v1830
        %1850 = vmatprep.subr.mxu0 0.0
        %1851 = vmatpush1.xpose.msra.mxu0 %v1828
        %1852 = vmatprep.subr.mxu0 0.0
        %1853 = vmatpush1.xpose.msra.mxu0 %v1826
        %1854 = vmatprep.subr.mxu0 0.0
        %1855 = vmatpush1.xpose.msra.mxu0 %v1824
        %1856 = vmatprep.subr.mxu0 0.0
        %1857 = vmatpush1.xpose.msra.mxu0 %v1822
        %1858 = vmatprep.subr.mxu0 0.0
        %1859 = vmatpush1.xpose.msra.mxu0 %v1820
        %1860 = vmatprep.subr.mxu0 0.0
        %1861 = vmatpush1.xpose.msra.mxu0 %v1818
        %1862 = vmatprep.subr.mxu0 0.0
        %1863 = vmatpush1.xpose.msra.mxu0 %v1816
        %1864 = vmatprep.subr.mxu0 0.0
        %1865 = vmatpush1.xpose.msra.mxu0 %v1814
        %1866 = vmatprep.subr.mxu0 0.0
        %1867 = vmatpush1.xpose.msra.mxu0 %v1812
        %1868 = vmatprep.subr.mxu0 0.0
        %1869 = vmatpush1.xpose.msra.mxu0 %v1810
        %1870 = vmatprep.subr.mxu0 0.0
        %1871 = vmatpush1.xpose.msra.mxu0 %v1808
        %1872 = vmatprep.subr.mxu0 0.0
        %1873 = vmatpush2.xpose.msra.mxu0 0.0
        %1874 = vmatprep.subr.mxu0 0.0
        %1875 = vmatpush2.xpose.msra.mxu0 0.0
        %1876 = vmatprep.subr.mxu0 0.0
        %1877 = vmatpush2.xpose.msra.mxu0 0.0
        %1878 = vmatprep.subr.mxu0 0.0
        %1879 = vmatpush2.xpose.msra.mxu0 0.0
        %1880 = vmatprep.subr.mxu0 0.0
        %1881 = vmatpush2.xpose.msra.mxu0 0.0
        %1882 = vmatprep.subr.mxu0 0.0
        %1883 = vmatpush2.xpose.msra.mxu0 0.0
        %1884 = vmatprep.subr.mxu0 0.0
        %1885 = vmatpush2.xpose.msra.mxu0 0.0
        %1886 = vmatprep.subr.mxu0 0.0
        %1887 = vmatpush2.xpose.msra.mxu0 0.0
        %1888 = vmatprep.subr.mxu0 0.0
        %1889 = vmatpush2.xpose.msra.mxu0 0.0
        %1890 = vmatprep.subr.mxu0 0.0
        %1891 = vmatpush2.xpose.msra.mxu0 0.0
        %1892 = vmatprep.subr.mxu0 0.0
        %1893 = vmatpush2.xpose.msra.mxu0 0.0
        %1894 = vmatprep.subr.mxu0 0.0
        %1895 = vmatpush2.xpose.msra.mxu0 0.0
        %1896 = vmatprep.subr.mxu0 0.0
        %1897 = vmatpush2.xpose.msra.mxu0 0.0
        %1898 = vmatprep.subr.mxu0 0.0
        %1899 = vmatpush2.xpose.msra.mxu0 0.0
        %1900 = vmatprep.subr.mxu0 0.0
        %1901 = vmatpush2.xpose.msra.mxu0 0.0
        %1902 = vmatprep.subr.mxu0 0.0
        %1903 = vmatpush2.xpose.msra.mxu0 0.0
        %1904 = vmatprep.mubr.f32.mxu0 0.0
        %1905 = vmatmul.mubr.f32.gmra.mxu0 %v1804
        %v1906 = vpop.f32.mrf.mxu0
        %v1907 = vadd.f32 0.0, %v1906
        %v1908 = vpop.f32.mrf.mxu0
        %1909 = vmatprep.mubr.f32.mxu0 0.0
        %1910 = vmatmul.mubr.f32.gmra.mxu0 %v1806
        %v1911 = vpop.f32.mrf.mxu0
        %v1912 = vadd.f32 0.0, %v1911
        %v1913 = vpop.f32.mrf.mxu0
        %1914 = vdwg.mxu0
        %v1915 = vmul.f32 %v1907, 0.17677669
        %v1916 = vmul.f32 %v1912, 0.17677669
        %1917 = vmax.xlane.f32.xlu0 %v1915
        %v1918 = vpop.xlane.xlu0 %1917
        %1919 = vmax.xlane.f32.xlu0 %v1916
        %v1920 = vpop.xlane.xlu0 %1919
        %v1921 = vsub.f32 %v1915, %v1918
        %v1922 = vsub.f32 %v1916, %v1920
        %v1923 = vmul.f32 %v1921, 1.442695
        %v1924 = vpow.pop %v1923
        %v1925 = vmul.f32 %v1922, 1.442695
        %v1926 = vpow.pop %v1925
        %1927 = vadd.xlane.f32.xlu0 %v1924
        %v1928 = vpop.xlane.xlu0 %1927
        %1929 = vadd.xlane.f32.xlu0 %v1926
        %v1930 = vpop.xlane.xlu0 %1929
        %v1931 = vrcp.pop %v1928
        %v1932 = vrcp.pop %v1930
        %v1933 = vmul.f32 %v1924, %v1931
        %v1934 = vmul.f32 %v1926, %v1932
        %v1935 = vadd.f32 %v1643, %v1933
        %v1936 = vadd.f32 %v1644, %v1934
        %1937 = vrot.lane.b32.xlu0 %v851, 32
        %v1938 = vpop.permute.xlu0 %1937
        %1939 = vrot.lane.b32.xlu0 %v857, 32
        %v1940 = vpop.permute.xlu0 %1939
        %1941 = vrot.lane.b32.xlu0 %v863, 32
        %v1942 = vpop.permute.xlu0 %1941
        %1943 = vrot.lane.b32.xlu0 %v869, 32
        %v1944 = vpop.permute.xlu0 %1943
        %1945 = vrot.lane.b32.xlu0 %v875, 32
        %v1946 = vpop.permute.xlu0 %1945
        %1947 = vrot.lane.b32.xlu0 %v881, 32
        %v1948 = vpop.permute.xlu0 %1947
        %1949 = vrot.lane.b32.xlu0 %v887, 32
        %v1950 = vpop.permute.xlu0 %1949
        %1951 = vrot.lane.b32.xlu0 %v893, 32
        %v1952 = vpop.permute.xlu0 %1951
        %1953 = vrot.lane.b32.xlu0 %v899, 32
        %v1954 = vpop.permute.xlu0 %1953
        %1955 = vrot.lane.b32.xlu0 %v905, 32
        %v1956 = vpop.permute.xlu0 %1955
        %1957 = vrot.lane.b32.xlu0 %v911, 32
        %v1958 = vpop.permute.xlu0 %1957
        %1959 = vrot.lane.b32.xlu0 %v917, 32
        %v1960 = vpop.permute.xlu0 %1959
        %1961 = vrot.lane.b32.xlu0 %v923, 32
        %v1962 = vpop.permute.xlu0 %1961
        %1963 = vrot.lane.b32.xlu0 %v929, 32
        %v1964 = vpop.permute.xlu0 %1963
        %1965 = vrot.lane.b32.xlu0 %v935, 32
        %v1966 = vpop.permute.xlu0 %1965
        %1967 = vrot.lane.b32.xlu0 %v941, 32
        %v1968 = vpop.permute.xlu0 %1967
        %1985 = vmatprep.subr.mxu0 0.0
        %1986 = vmatpush1.msra.mxu0 %v1968
        %1987 = vmatprep.subr.mxu0 0.0
        %1988 = vmatpush1.msra.mxu0 %v1966
        %1989 = vmatprep.subr.mxu0 0.0
        %1990 = vmatpush1.msra.mxu0 %v1964
        %1991 = vmatprep.subr.mxu0 0.0
        %1992 = vmatpush1.msra.mxu0 %v1962
        %1993 = vmatprep.subr.mxu0 0.0
        %1994 = vmatpush1.msra.mxu0 %v1960
        %1995 = vmatprep.subr.mxu0 0.0
        %1996 = vmatpush1.msra.mxu0 %v1958
        %1997 = vmatprep.subr.mxu0 0.0
        %1998 = vmatpush1.msra.mxu0 %v1956
        %1999 = vmatprep.subr.mxu0 0.0
        %2000 = vmatpush1.msra.mxu0 %v1954
        %2001 = vmatprep.subr.mxu0 0.0
        %2002 = vmatpush1.msra.mxu0 %v1952
        %2003 = vmatprep.subr.mxu0 0.0
        %2004 = vmatpush1.msra.mxu0 %v1950
        %2005 = vmatprep.subr.mxu0 0.0
        %2006 = vmatpush1.msra.mxu0 %v1948
        %2007 = vmatprep.subr.mxu0 0.0
        %2008 = vmatpush1.msra.mxu0 %v1946
        %2009 = vmatprep.subr.mxu0 0.0
        %2010 = vmatpush1.msra.mxu0 %v1944
        %2011 = vmatprep.subr.mxu0 0.0
        %2012 = vmatpush1.msra.mxu0 %v1942
        %2013 = vmatprep.subr.mxu0 0.0
        %2014 = vmatpush1.msra.mxu0 %v1940
        %2015 = vmatprep.subr.mxu0 0.0
        %2016 = vmatpush1.msra.mxu0 %v1938
        %2017 = vmatprep.subr.mxu0 0.0
        %2018 = vmatpush2.msra.mxu0 0.0
        %2019 = vmatprep.subr.mxu0 0.0
        %2020 = vmatpush2.msra.mxu0 0.0
        %2021 = vmatprep.subr.mxu0 0.0
        %2022 = vmatpush2.msra.mxu0 0.0
        %2023 = vmatprep.subr.mxu0 0.0
        %2024 = vmatpush2.msra.mxu0 0.0
        %2025 = vmatprep.subr.mxu0 0.0
        %2026 = vmatpush2.msra.mxu0 0.0
        %2027 = vmatprep.subr.mxu0 0.0
        %2028 = vmatpush2.msra.mxu0 0.0
        %2029 = vmatprep.subr.mxu0 0.0
        %2030 = vmatpush2.msra.mxu0 0.0
        %2031 = vmatprep.subr.mxu0 0.0
        %2032 = vmatpush2.msra.mxu0 0.0
        %2033 = vmatprep.subr.mxu0 0.0
        %2034 = vmatpush2.msra.mxu0 0.0
        %2035 = vmatprep.subr.mxu0 0.0
        %2036 = vmatpush2.msra.mxu0 0.0
        %2037 = vmatprep.subr.mxu0 0.0
        %2038 = vmatpush2.msra.mxu0 0.0
        %2039 = vmatprep.subr.mxu0 0.0
        %2040 = vmatpush2.msra.mxu0 0.0
        %2041 = vmatprep.subr.mxu0 0.0
        %2042 = vmatpush2.msra.mxu0 0.0
        %2043 = vmatprep.subr.mxu0 0.0
        %2044 = vmatpush2.msra.mxu0 0.0
        %2045 = vmatprep.subr.mxu0 0.0
        %2046 = vmatpush2.msra.mxu0 0.0
        %2047 = vmatprep.subr.mxu0 0.0
        %2048 = vmatpush2.msra.mxu0 0.0
        %2049 = vmatprep.mubr.f32.mxu0 0.0
        %2050 = vmatmul.mubr.f32.gmra.mxu0 %v1933
        %v2051 = vpop.f32.mrf.mxu0
        %v2052 = vadd.f32 0.0, %v2051
        %v2053 = vpop.f32.mrf.mxu0
        %2054 = vmatprep.mubr.f32.mxu0 0.0
        %2055 = vmatmul.mubr.f32.gmra.mxu0 %v1934
        %v2056 = vpop.f32.mrf.mxu0
        %v2057 = vadd.f32 0.0, %v2056
        %v2058 = vpop.f32.mrf.mxu0
        %2059 = vdwg.mxu0
        %v2060 = vmul.f32 %v1935, 0.25
        %v2061 = vmul.f32 %v1936, 0.25
        %2062 = vst [vmem:[%s621] sm:$0xff] %v2060
        %2063 = vst [vmem:[%s621 + $0x8] sm:$0xff] %v2061
        %2066 = vrot.lane.b32.xlu0 %v1468, 32
        %v2067 = vpop.permute.xlu0 %2066
        %2068 = vrot.lane.b32.xlu0 %v1473, 32
        %v2069 = vpop.permute.xlu0 %2068
        %2074 = vrot.lane.b32.xlu0 %v1760, 64
        %v2075 = vpop.permute.xlu0 %2074
        %2076 = vrot.lane.b32.xlu0 %v1765, 64
        %v2077 = vpop.permute.xlu0 %2076
        %2082 = vrot.lane.b32.xlu0 %v2052, 96
        %v2083 = vpop.permute.xlu0 %2082
        %2084 = vrot.lane.b32.xlu0 %v2057, 96
        %v2085 = vpop.permute.xlu0 %2084
        %v2088 = vsel %vm943, %v1160, %v2067
        %v2089 = vsel %vm943, %v1165, %v2069
        %vm2090 = vcmask 523264
        %v2091 = vsel %vm2090, %v2088, %v2075
        %v2092 = vsel %vm2090, %v2089, %v2077
        %vm2093 = vcmask 785408
        %v2094 = vsel %vm2093, %v2091, %v2083
        %v2095 = vsel %vm2093, %v2092, %v2085
        %v2096 = vld [vmem:[#allocation10] sm:$0xff]
        %v2097 = vld [vmem:[#allocation10 + $0x8] sm:$0xff]
        %v2098 = vld [vmem:[#allocation10 + $0x10] sm:$0xff]
        %v2099 = vld [vmem:[#allocation10 + $0x18] sm:$0xff]
        %v2100 = vld [vmem:[#allocation10 + $0x20] sm:$0xff]
        %v2101 = vld [vmem:[#allocation10 + $0x28] sm:$0xff]
        %v2102 = vld [vmem:[#allocation10 + $0x30] sm:$0xff]
        %v2103 = vld [vmem:[#allocation10 + $0x38] sm:$0xff]
        %v2104 = vld [vmem:[#allocation10 + $0x40] sm:$0xff]
        %v2105 = vld [vmem:[#allocation10 + $0x48] sm:$0xff]
        %v2106 = vld [vmem:[#allocation10 + $0x50] sm:$0xff]
        %v2107 = vld [vmem:[#allocation10 + $0x58] sm:$0xff]
        %v2108 = vld [vmem:[#allocation10 + $0x60] sm:$0xff]
        %v2109 = vld [vmem:[#allocation10 + $0x68] sm:$0xff]
        %v2110 = vld [vmem:[#allocation10 + $0x70] sm:$0xff]
        %v2111 = vld [vmem:[#allocation10 + $0x78] sm:$0xff]
        %v2112 = vld [vmem:[%s7] sm:$0x1]
        %v2114 = vlaneseq
        %v2115 = vshrl.u32 %v2114, 7
        %v2116 = vsub.s32 0, %v2115
        %v2117 = vrot.slane %v2112, %v2116
        %2119 = vmatprep.subr.mxu0 0.0
        %2120 = vmatpush1.msra.mxu0 %v2111
        %2121 = vmatprep.subr.mxu0 0.0
        %2122 = vmatpush1.msra.mxu0 %v2110
        %2123 = vmatprep.subr.mxu0 0.0
        %2124 = vmatpush1.msra.mxu0 %v2109
        %2125 = vmatprep.subr.mxu0 0.0
        %2126 = vmatpush1.msra.mxu0 %v2108
        %2127 = vmatprep.subr.mxu0 0.0
        %2128 = vmatpush1.msra.mxu0 %v2107
        %2129 = vmatprep.subr.mxu0 0.0
        %2130 = vmatpush1.msra.mxu0 %v2106
        %2131 = vmatprep.subr.mxu0 0.0
        %2132 = vmatpush1.msra.mxu0 %v2105
        %2133 = vmatprep.subr.mxu0 0.0
        %2134 = vmatpush1.msra.mxu0 %v2104
        %2135 = vmatprep.subr.mxu0 0.0
        %2136 = vmatpush1.msra.mxu0 %v2103
        %2137 = vmatprep.subr.mxu0 0.0
        %2138 = vmatpush1.msra.mxu0 %v2102
        %2139 = vmatprep.subr.mxu0 0.0
        %2140 = vmatpush1.msra.mxu0 %v2101
        %2141 = vmatprep.subr.mxu0 0.0
        %2142 = vmatpush1.msra.mxu0 %v2100
        %2143 = vmatprep.subr.mxu0 0.0
        %2144 = vmatpush1.msra.mxu0 %v2099
        %2145 = vmatprep.subr.mxu0 0.0
        %2146 = vmatpush1.msra.mxu0 %v2098
        %2147 = vmatprep.subr.mxu0 0.0
        %2148 = vmatpush1.msra.mxu0 %v2097
        %2149 = vmatprep.subr.mxu0 0.0
        %2150 = vmatpush1.msra.mxu0 %v2096
        %2151 = vmatprep.subr.mxu0 0.0
        %2152 = vmatpush2.msra.mxu0 0.0
        %2153 = vmatprep.subr.mxu0 0.0
        %2154 = vmatpush2.msra.mxu0 0.0
        %2155 = vmatprep.subr.mxu0 0.0
        %2156 = vmatpush2.msra.mxu0 0.0
        %2157 = vmatprep.subr.mxu0 0.0
        %2158 = vmatpush2.msra.mxu0 0.0
        %2159 = vmatprep.subr.mxu0 0.0
        %2160 = vmatpush2.msra.mxu0 0.0
        %2161 = vmatprep.subr.mxu0 0.0
        %2162 = vmatpush2.msra.mxu0 0.0
        %2163 = vmatprep.subr.mxu0 0.0
        %2164 = vmatpush2.msra.mxu0 0.0
        %2165 = vmatprep.subr.mxu0 0.0
        %2166 = vmatpush2.msra.mxu0 0.0
        %2167 = vmatprep.subr.mxu0 0.0
        %2168 = vmatpush2.msra.mxu0 0.0
        %2169 = vmatprep.subr.mxu0 0.0
        %2170 = vmatpush2.msra.mxu0 0.0
        %2171 = vmatprep.subr.mxu0 0.0
        %2172 = vmatpush2.msra.mxu0 0.0
        %2173 = vmatprep.subr.mxu0 0.0
        %2174 = vmatpush2.msra.mxu0 0.0
        %2175 = vmatprep.subr.mxu0 0.0
        %2176 = vmatpush2.msra.mxu0 0.0
        %2177 = vmatprep.subr.mxu0 0.0
        %2178 = vmatpush2.msra.mxu0 0.0
        %2179 = vmatprep.subr.mxu0 0.0
        %2180 = vmatpush2.msra.mxu0 0.0
        %2181 = vmatprep.subr.mxu0 0.0
        %2182 = vmatpush2.msra.mxu0 0.0
        %2183 = vmatprep.mubr.f32.mxu0 0.0
        %2184 = vmatmul.mubr.f32.gmra.mxu0 %v2094
        %v2185 = vpop.f32.mrf.mxu0
        %v2186 = vadd.f32 %v2117, %v2185
        %v2187 = vpop.f32.mrf.mxu0
        %2188 = vmatprep.mubr.f32.mxu0 0.0
        %2189 = vmatmul.mubr.f32.gmra.mxu0 %v2095
        %v2190 = vpop.f32.mrf.mxu0
        %v2191 = vadd.f32 %v2117, %v2190
        %v2192 = vpop.f32.mrf.mxu0
        %2193 = vdwg.mxu0
        %v2194 = vadd.f32 %v622, %v2186
        %v2195 = vadd.f32 %v623, %v2191
        %v2196 = vld [vmem:[%s8] sm:$0x1]
        %v2197 = vld [vmem:[%s9] sm:$0x1]
        %2198 = vadd.xlane.f32.xlu0 %v2194
        %v2199 = vpop.xlane.xlu0 %2198
        %2200 = vadd.xlane.f32.xlu0 %v2195
        %v2201 = vpop.xlane.xlu0 %2200
        %v2202 = vrcp.pop 128.0
        %v2203 = vmul.f32 %v2199, %v2202
        %v2204 = vmul.f32 %v2201, %v2202
        %v2205 = vsub.f32 %v2194, %v2203
        %v2206 = vsub.f32 %v2195, %v2204
        %v2207 = vmul.f32 %v2205, %v2205
        %v2208 = vmul.f32 %v2206, %v2206
        %2209 = vadd.xlane.f32.xlu0 %v2207
        %v2210 = vpop.xlane.xlu0 %2209
        %2211 = vadd.xlane.f32.xlu0 %v2208
        %v2212 = vpop.xlane.xlu0 %2211
        %v2213 = vmul.f32 %v2210, %v2202
        %v2214 = vmul.f32 %v2212, %v2202
        %v2215 = vadd.f32 %v2213, 1e-05
        %v2216 = vadd.f32 %v2214, 1e-05
        %v2217 = vrsqrt.pop %v2215
        %v2218 = vrsqrt.pop %v2216
        %v2219 = vmul.f32 %v2205, %v2217
        %v2220 = vmul.f32 %v2206, %v2218
        %v2222 = vlaneseq
        %v2223 = vshrl.u32 %v2222, 7
        %v2224 = vsub.s32 0, %v2223
        %v2225 = vrot.slane %v2196, %v2224
        %v2227 = vmul.f32 %v2219, %v2225
        %v2228 = vmul.f32 %v2220, %v2225
        %v2230 = vlaneseq
        %v2231 = vshrl.u32 %v2230, 7
        %v2232 = vsub.s32 0, %v2231
        %v2233 = vrot.slane %v2197, %v2232
        %v2235 = vadd.f32 %v2227, %v2233
        %v2236 = vadd.f32 %v2228, %v2233
        %v2237 = vld [vmem:[#allocation11] sm:$0xff]
        %v2238 = vld [vmem:[#allocation11 + $0x8] sm:$0xff]
        %v2239 = vld [vmem:[#allocation11 + $0x10] sm:$0xff]
        %v2240 = vld [vmem:[#allocation11 + $0x18] sm:$0xff]
        %v2241 = vld [vmem:[#allocation11 + $0x20] sm:$0xff]
        %v2242 = vld [vmem:[#allocation11 + $0x28] sm:$0xff]
        %v2243 = vld [vmem:[#allocation11 + $0x30] sm:$0xff]
        %v2244 = vld [vmem:[#allocation11 + $0x38] sm:$0xff]
        %v2245 = vld [vmem:[#allocation11 + $0x40] sm:$0xff]
        %v2246 = vld [vmem:[#allocation11 + $0x48] sm:$0xff]
        %v2247 = vld [vmem:[#allocation11 + $0x50] sm:$0xff]
        %v2248 = vld [vmem:[#allocation11 + $0x58] sm:$0xff]
        %v2249 = vld [vmem:[#allocation11 + $0x60] sm:$0xff]
        %v2250 = vld [vmem:[#allocation11 + $0x68] sm:$0xff]
        %v2251 = vld [vmem:[#allocation11 + $0x70] sm:$0xff]
        %v2252 = vld [vmem:[#allocation11 + $0x78] sm:$0xff]
        %v2253 = vld [vmem:[%s11] sm:$0x1]
        %v2255 = vlaneseq
        %v2256 = vshrl.u32 %v2255, 7
        %v2257 = vsub.s32 0, %v2256
        %v2258 = vrot.slane %v2253, %v2257
        %2260 = vmatprep.subr.mxu0 0.0
        %2261 = vmatpush1.msra.mxu0 %v2252
        %2262 = vmatprep.subr.mxu0 0.0
        %2263 = vmatpush1.msra.mxu0 %v2251
        %2264 = vmatprep.subr.mxu0 0.0
        %2265 = vmatpush1.msra.mxu0 %v2250
        %2266 = vmatprep.subr.mxu0 0.0
        %2267 = vmatpush1.msra.mxu0 %v2249
        %2268 = vmatprep.subr.mxu0 0.0
        %2269 = vmatpush1.msra.mxu0 %v2248
        %2270 = vmatprep.subr.mxu0 0.0
        %2271 = vmatpush1.msra.mxu0 %v2247
        %2272 = vmatprep.subr.mxu0 0.0
        %2273 = vmatpush1.msra.mxu0 %v2246
        %2274 = vmatprep.subr.mxu0 0.0
        %2275 = vmatpush1.msra.mxu0 %v2245
        %2276 = vmatprep.subr.mxu0 0.0
        %2277 = vmatpush1.msra.mxu0 %v2244
        %2278 = vmatprep.subr.mxu0 0.0
        %2279 = vmatpush1.msra.mxu0 %v2243
        %2280 = vmatprep.subr.mxu0 0.0
        %2281 = vmatpush1.msra.mxu0 %v2242
        %2282 = vmatprep.subr.mxu0 0.0
        %2283 = vmatpush1.msra.mxu0 %v2241
        %2284 = vmatprep.subr.mxu0 0.0
        %2285 = vmatpush1.msra.mxu0 %v2240
        %2286 = vmatprep.subr.mxu0 0.0
        %2287 = vmatpush1.msra.mxu0 %v2239
        %2288 = vmatprep.subr.mxu0 0.0
        %2289 = vmatpush1.msra.mxu0 %v2238
        %2290 = vmatprep.subr.mxu0 0.0
        %2291 = vmatpush1.msra.mxu0 %v2237
        %2292 = vmatprep.subr.mxu0 0.0
        %2293 = vmatpush2.msra.mxu0 0.0
        %2294 = vmatprep.subr.mxu0 0.0
        %2295 = vmatpush2.msra.mxu0 0.0
        %2296 = vmatprep.subr.mxu0 0.0
        %2297 = vmatpush2.msra.mxu0 0.0
        %2298 = vmatprep.subr.mxu0 0.0
        %2299 = vmatpush2.msra.mxu0 0.0
        %2300 = vmatprep.subr.mxu0 0.0
        %2301 = vmatpush2.msra.mxu0 0.0
        %2302 = vmatprep.subr.mxu0 0.0
        %2303 = vmatpush2.msra.mxu0 0.0
        %2304 = vmatprep.subr.mxu0 0.0
        %2305 = vmatpush2.msra.mxu0 0.0
        %2306 = vmatprep.subr.mxu0 0.0
        %2307 = vmatpush2.msra.mxu0 0.0
        %2308 = vmatprep.subr.mxu0 0.0
        %2309 = vmatpush2.msra.mxu0 0.0
        %2310 = vmatprep.subr.mxu0 0.0
        %2311 = vmatpush2.msra.mxu0 0.0
        %2312 = vmatprep.subr.mxu0 0.0
        %2313 = vmatpush2.msra.mxu0 0.0
        %2314 = vmatprep.subr.mxu0 0.0
        %2315 = vmatpush2.msra.mxu0 0.0
        %2316 = vmatprep.subr.mxu0 0.0
        %2317 = vmatpush2.msra.mxu0 0.0
        %2318 = vmatprep.subr.mxu0 0.0
        %2319 = vmatpush2.msra.mxu0 0.0
        %2320 = vmatprep.subr.mxu0 0.0
        %2321 = vmatpush2.msra.mxu0 0.0
        %2322 = vmatprep.subr.mxu0 0.0
        %2323 = vmatpush2.msra.mxu0 0.0
        %2324 = vmatprep.mubr.f32.mxu0 0.0
        %2325 = vmatmul.mubr.f32.gmra.mxu0 %v2235
        %v2326 = vpop.f32.mrf.mxu0
        %v2327 = vadd.f32 %v2258, %v2326
        %v2328 = vpop.f32.mrf.mxu0
        %2329 = vmatprep.mubr.f32.mxu0 0.0
        %2330 = vmatmul.mubr.f32.gmra.mxu0 %v2236
        %v2331 = vpop.f32.mrf.mxu0
        %v2332 = vadd.f32 %v2258, %v2331
        %v2333 = vpop.f32.mrf.mxu0
        %2334 = vdwg.mxu0
        %v2335 = vld [vmem:[%s12] sm:$0x1]
        %v2336 = vld [vmem:[%s13] sm:$0x1]
        %2337 = vadd.xlane.f32.xlu0 %v2327
        %v2338 = vpop.xlane.xlu0 %2337
        %2339 = vadd.xlane.f32.xlu0 %v2332
        %v2340 = vpop.xlane.xlu0 %2339
        %v2341 = vmul.f32 %v2338, %v2202
        %v2342 = vmul.f32 %v2340, %v2202
        %v2343 = vsub.f32 %v2327, %v2341
        %v2344 = vsub.f32 %v2332, %v2342
        %v2345 = vmul.f32 %v2343, %v2343
        %v2346 = vmul.f32 %v2344, %v2344
        %2347 = vadd.xlane.f32.xlu0 %v2345
        %v2348 = vpop.xlane.xlu0 %2347
        %2349 = vadd.xlane.f32.xlu0 %v2346
        %v2350 = vpop.xlane.xlu0 %2349
        %v2351 = vmul.f32 %v2348, %v2202
        %v2352 = vmul.f32 %v2350, %v2202
        %v2353 = vadd.f32 %v2351, 1e-05
        %v2354 = vadd.f32 %v2352, 1e-05
        %v2355 = vrsqrt.pop %v2353
        %v2356 = vrsqrt.pop %v2354
        %v2357 = vmul.f32 %v2343, %v2355
        %v2358 = vmul.f32 %v2344, %v2356
        %v2360 = vlaneseq
        %v2361 = vshrl.u32 %v2360, 7
        %v2362 = vsub.s32 0, %v2361
        %v2363 = vrot.slane %v2335, %v2362
        %v2365 = vmul.f32 %v2357, %v2363
        %v2366 = vmul.f32 %v2358, %v2363
        %v2368 = vlaneseq
        %v2369 = vshrl.u32 %v2368, 7
        %v2370 = vsub.s32 0, %v2369
        %v2371 = vrot.slane %v2336, %v2370
        %v2373 = vadd.f32 %v2365, %v2371
        %v2374 = vadd.f32 %v2366, %v2371
        %2375 = vst [vmem:[%s614] sm:$0xff] %v2373
        %2376 = vst [vmem:[%s614 + $0x8] sm:$0xff] %v2374
        %s2377 = sand.u32 %s353, 1
        %s2378 = scalar_lea.sflag [#allocation4], %s2377
        %s2379 = sand.u32 %s353, 1
        %s2380 = smul.addr %s2379, 16
        %s2381 = scalar_lea.vmem [#allocation13], %s2380
        %s2382 = sand.u32 %s379, 1
        %s2383 = scalar_lea.sflag [#allocation15], %s2382
        %s2384 = sand.u32 %s379, 1
        %s2385 = smul.addr %s2384, 16
        %s2386 = scalar_lea.vmem [#allocation14], %s2385
        // Predicated region
        $region101: #{tpu_custom_call.1} parent=75 // pred_check
          %p2387 = pneg %p363
        $region102: #{tpu_custom_call.1} parent=75 // pred_check_branch
          %2389 = sbr.rel (%p2387) target = $region104
        $region103: #{tpu_custom_call.1} parent=75 // pred_region
          %s2391 = ssub.s32 256, 256
          %2392 = vsyncadd %s2378, %s2391
          %s2393 = smul.addr %s41, 2
          %s2394 = smul.addr %s2393, 128
          %s2395 = scalar_lea.hbm %s14, %s2394
          %s2396 = sshll.u32 %s2381, 4
          %s2397 = int_to_ptr.vmem [resolvable:$true] %s2396
          %2402 = dma.vmem_to_hbm [thread:$0]  %s2397, 256, %s2395, %s2378, 128, 128, 8
        $region104: #{tpu_custom_call.1} parent=75 // pred_fallthru
          _
        // Predicated region
        $region105: #{tpu_custom_call.1} parent=75 // pred_check
          %p2403 = pneg %p389
        $region106: #{tpu_custom_call.1} parent=75 // pred_check_branch
          %2405 = sbr.rel (%p2403) target = $region108
        $region107: #{tpu_custom_call.1} parent=75 // pred_region
          %s2407 = ssub.s32 256, 256
          %2408 = vsyncadd %s2383, %s2407
          %s2409 = smul.addr %s41, 2
          %s2410 = smul.addr %s2409, 128
          %s2411 = scalar_lea.hbm %s15, %s2410
          %s2412 = sshll.u32 %s2386, 4
          %s2413 = int_to_ptr.vmem [resolvable:$true] %s2412
          %2418 = dma.vmem_to_hbm [thread:$0]  %s2413, 256, %s2411, %s2383, 128, 128, 8
        $region108: #{tpu_custom_call.1} parent=75 // pred_fallthru
          _
      $region76: #{tpu_custom_call.1} parent=5 // pred_fallthru
        _
      %p2419 = scmp.le.s32.totalorder 2, %s36
      // Predicated region
      $region109: #{tpu_custom_call.1} parent=5 // pred_check
        %p2420 = pneg %p2419
      $region110: #{tpu_custom_call.1} parent=5 // pred_check_branch
        %2422 = sbr.rel (%p2420) target = $region112
      $region111: #{tpu_custom_call.1} parent=5 // pred_region
        %s2423 = ssub.s32 %s36, 2
        // Predicated region
        $region113: #{tpu_custom_call.1} parent=111 // pred_check
          %p2424 = pneg %p369
        $region114: #{tpu_custom_call.1} parent=111 // pred_check_branch
          %2426 = sbr.rel (%p2424) target = $region116
        $region115: #{tpu_custom_call.1} parent=111 // pred_region
          %s2427 = sand.u32 %s354, 1
          %s2428 = scalar_lea.sflag [#allocation4], %s2427
          %s2429 = sand.u32 %s354, 1
          %s2430 = smul.addr %s2429, 16
          %s2431 = scalar_lea.vmem [#allocation13], %s2430
          %2432 = dma.done %s2428, 256
        $region116: #{tpu_custom_call.1} parent=111 // pred_fallthru
          _
        // Predicated region
        $region117: #{tpu_custom_call.1} parent=111 // pred_check
          %p2433 = pneg %p395
        $region118: #{tpu_custom_call.1} parent=111 // pred_check_branch
          %2435 = sbr.rel (%p2433) target = $region120
        $region119: #{tpu_custom_call.1} parent=111 // pred_region
          %s2436 = sand.u32 %s380, 1
          %s2437 = scalar_lea.sflag [#allocation15], %s2436
          %s2438 = sand.u32 %s380, 1
          %s2439 = smul.addr %s2438, 16
          %s2440 = scalar_lea.vmem [#allocation14], %s2439
          %2441 = dma.done %s2437, 256
        $region120: #{tpu_custom_call.1} parent=111 // pred_fallthru
          _
      $region112: #{tpu_custom_call.1} parent=5 // pred_fallthru
        _
    $region6: #{tpu_custom_call.1} parent=1 // loop_footer
      %s40 = sadd.s32 1, %s36
    $region7: #{tpu_custom_call.1} parent=1 // loop_footer_branch
      %35 = sbr.rel target = $region3
    $region8: #{tpu_custom_call.1} parent=1 // loop_exit
      _
    %2442 = vsyncpa [#allocation3], 1
    %s2443 = scalar_lea.sflag [#allocation3], 1
    %2444 = vsyncpa %s2443, 1
    %2445 = vsyncpa [#allocation6], 1
    %s2446 = scalar_lea.sflag [#allocation6], 1
    %2447 = vsyncpa %s2446, 1
    %2448 = vsyncpa [#allocation9], 1
    %2449 = vsyncpa [#allocation12], 1
    %2450 = vsyncpa [#allocation4], 1
    %s2451 = scalar_lea.sflag [#allocation4], 1
    %2452 = vsyncpa %s2451, 1
    %2453 = vsyncpa [#allocation15], 1
    %s2454 = scalar_lea.sflag [#allocation15], 1
    %2455 = vsyncpa %s2454, 1

</llo_original>
